<compile_context>
chip_gen: v6e
topology: v6e:2x2x1
jax: 0.10.0
libtpu: 0.0.40
codegen_flags: <defaults>
</compile_context>

<pallas_src>
import numpy as np
import jax
import jax.numpy as jnp
from jax.experimental import pallas as pl
from jax.experimental.pallas import tpu as pltpu

LEAKY_SLOPE = 0.01   # nn.LeakyReLU() default
BN_EPS = 1e-5        # nn.BatchNorm2d default


def _vmem():
    return pl.BlockSpec(memory_space=pltpu.MemorySpace.VMEM)


# ----------------------- init-time weight packing -----------------------------

def _taps(v, f):
    # For packed-output phase v in [0, 2f): list of (d, u, k):
    #   d: packed-cell offset (0 = same cell, 1 = next cell down/right)
    #   u: input packed phase in [0, f)
    #   k: ConvTranspose2d kernel tap index in {0, 1, 2}
    # derived from  out[oy] += x[iy] * w[.., k]  with  oy = 2*iy - 1 + k.
    if v % 2 == 0:
        return [(0, v // 2, 1)]
    if v < 2 * f - 1:
        return [(0, (v - 1) // 2, 2), (0, (v + 1) // 2, 0)]
    return [(0, (v - 1) // 2, 2), (1, 0, 0)]


def _pack_convt(w_t, b_t, f, cin_pad, cout_pad):
    """Pack a ConvTranspose2d(k=3,s=2,p=1,op=1) weight (cin,cout,3,3) into one
    (4*f*f*cin_pad, (2f)*(2f)*cout_pad) matrix acting on the space-to-depth
    packed activation (input packed by f with cin_pad channels per phase,
    output packed by 2f with cout_pad channels per phase; pad entries are 0)."""
    w_t = np.asarray(w_t, np.float32)
    b_t = np.asarray(b_t, np.float32)
    cin, cout = w_t.shape[0], w_t.shape[1]
    fo = 2 * f
    W = np.zeros((2, 2, f, f, cin_pad, fo, fo, cout_pad), np.float32)
    for vy in range(fo):
        for dy, uy, ky in _taps(vy, f):
            for vx in range(fo):
                for dx, ux, kx in _taps(vx, f):
                    W[dy, dx, uy, ux, :cin, vy, vx, :cout] += w_t[:, :, ky, kx]
    W = W.reshape(4 * f * f * cin_pad, fo * fo * cout_pad)
    b = np.zeros((fo * fo, cout_pad), np.float32)
    b[:, :cout] = b_t.reshape(1, cout)
    return W, b.reshape(1, fo * fo * cout_pad)


def _fold_fc_conv1(fc_w, fc_b, w1, b1, c0, s, cout_pad):
    """Compose Linear + NCHW .view permutation + 2x2-cell im2col + packed
    ConvT1 into a single (latent, s*s*4*cout_pad) weight + bias (init-time)."""
    fc_w = np.asarray(fc_w, np.float32)          # (F, latent), torch layout
    fc_b = np.asarray(fc_b, np.float32)          # (F,)
    latent = fc_w.shape[1]
    # FC columns permuted to (position-major, channel-minor): col p*c0+c equals
    # torch feature c*s*s + p, i.e. the NCHW .view is baked into the weight.
    idx = np.empty(c0 * s * s, np.int64)
    for p in range(s * s):
        for c in range(c0):
            idx[p * c0 + c] = c * s * s + p
    FCW = fc_w.T[:, idx]                         # (latent, s*s*c0)
    fcb = fc_b[idx]                              # (s*s*c0,)

    W1, b1p = _pack_convt(w1, b1, 1, c0, cout_pad)   # (4*c0, 4*cout_pad)
    pc = W1.shape[1]                                 # per-cell packed out width
    neighbors = [(0, 0), (0, 1), (1, 0), (1, 1)]     # (dy, dx) row-major

    Wc = np.zeros((latent, s * s * pc), np.float32)
    bc = np.zeros((1, s * s * pc), np.float32)
    for i in range(s):
        for j in range(s):
            p = i * s + j
            Fp = np.zeros((latent, 4 * c0), np.float32)
            bp = np.zeros((4 * c0,), np.float32)
            for n, (di, dj) in enumerate(neighbors):
                ii, jj = i + di, j + dj
                if ii < s and jj < s:                # out-of-grid cells are 0
                    q = ii * s + jj
                    Fp[:, n * c0:(n + 1) * c0] = FCW[:, q * c0:(q + 1) * c0]
                    bp[n * c0:(n + 1) * c0] = fcb[q * c0:(q + 1) * c0]
            Wc[:, p * pc:(p + 1) * pc] = Fp @ W1
            bc[0, p * pc:(p + 1) * pc] = bp @ W1 + b1p[0]
    return Wc, bc


# ------------------------------ fused kernel ----------------------------------

def _phase_allreduce(v, cpad):
    """v: (1, W) with W = n_blocks*cpad (n_blocks a power of two).  Returns
    (1, W) where every lane i holds sum over blocks of channel i % cpad
    (fold + broadcast in one log-tree of XLU lane rolls)."""
    width = v.shape[-1]
    shift = cpad
    while shift < width:
        v = v + pltpu.roll(v, shift=shift, axis=1)
        shift *= 2
    return v


def _bn_lrelu(y, gamma_row, beta_row, cpad):
    """Training-mode BatchNorm2d (batch stats over rows x phase blocks) fused
    with LeakyReLU.  gamma_row/beta_row are pre-tiled to (1, W) at init."""
    rows, width = y.shape
    nblk = width // cpad
    inv = 1.0 / (rows * nblk)
    csum = jnp.sum(y, axis=0, keepdims=True)
    cssq = jnp.sum(y * y, axis=0, keepdims=True)
    mean = _phase_allreduce(csum, cpad) * inv
    msq = _phase_allreduce(cssq, cpad) * inv
    var = msq - mean * mean
    scale = gamma_row * jax.lax.rsqrt(var + BN_EPS)
    shift = beta_row - mean * scale
    y = y * scale + shift
    return jnp.maximum(y, LEAKY_SLOPE * y)


def _build_kernel(batch, s, meta):
    n_layers = len(meta)

    def kernel(*refs):
        idx = 0
        z_ref = refs[idx]; idx += 1

        y = None
        wide = False
        for li in range(n_layers):
            w_ref, b_ref = refs[idx], refs[idx + 1]
            idx += 2

            if li == 0:
                # FC + .view + im2col + ConvT1, all folded into one bf16 matmul.
                zb = z_ref[...].astype(jnp.bfloat16)
                y = jnp.dot(zb, w_ref[...],
                            preferred_element_type=jnp.float32) + b_ref[...]
                wide = True                      # (B, s*s*pc0) wide layout
            else:
                cw = meta[li - 1]["pc"]          # per-cell input width (x128)
                src = y.astype(jnp.bfloat16)     # cast once; im2col in bf16
                zero = jnp.zeros((batch, cw), jnp.bfloat16)

                if wide:
                    def cell(ii, jj, _s=src, _cw=cw, _z=zero):
                        if 0 <= ii < s and 0 <= jj < s:
                            q = ii * s + jj
                            return _s[:, q * _cw:(q + 1) * _cw]   # 128-aligned
                        return _z
                else:
                    def cell(ii, jj, _s=src, _z=zero):
                        if 0 <= ii < s and 0 <= jj < s:
                            q = ii * s + jj
                            return _s[q * batch:(q + 1) * batch, :]  # 8-row aligned
                        return _z

                # im2col over the 2x2 packed-cell neighbourhood; all slices /
                # concats are lane- (128) and sublane- (batch%8==0) aligned.
                rows = []
                for ii in range(s):
                    for jj in range(s):
                        rows.append(jnp.concatenate(
                            [cell(ii, jj), cell(ii, jj + 1),
                             cell(ii + 1, jj), cell(ii + 1, jj + 1)], axis=1))
                patches = jnp.concatenate(rows, axis=0)   # (s*s*B, 4*cw) bf16

                # One matmul == one whole ConvTranspose2d layer.
                y = jnp.dot(patches, w_ref[...],
                            preferred_element_type=jnp.float32) + b_ref[...]
                wide = False

            if meta[li]["has_bn"]:
                g_ref, be_ref = refs[idx], refs[idx + 1]
                idx += 2
                y = _bn_lrelu(y, g_ref[...], be_ref[...], meta[li]["cout_pad"])
            else:
                y = jnp.tanh(y)

        refs[idx][...] = y                        # (s*s*B, f_out^2 * cout_pad)

    return kernel


# ------------------------------ parameters ------------------------------------

def init_params(key, latent_dim, output_channels, hidden_dims, image_size):
    nl = len(hidden_dims)
    assert nl >= 2, "this packing assumes at least one BN layer"
    s = image_size // (2 ** nl)
    c0 = hidden_dims[0]
    fdim = c0 * s * s
    keys = iter(jax.random.split(key, 4 * nl + 4))

    # torch-layout parameters (used by the pure-JAX reference)
    torch_p = {
        "fc_w": 0.1 * jax.random.normal(next(keys), (fdim, latent_dim), jnp.float32),
        "fc_b": 0.1 * jax.random.normal(next(keys), (fdim,), jnp.float32),
        "layers": [],
    }
    chans = list(hidden_dims) + [output_channels]
    for i in range(nl):
        cin, cout = chans[i], chans[i + 1]
        layer = {
            "w": 0.1 * jax.random.normal(next(keys), (cin, cout, 3, 3), jnp.float32),
            "b": 0.1 * jax.random.normal(next(keys), (cout,), jnp.float32),
        }
        if i < nl - 1:
            layer["gamma"] = 1.0 + 0.1 * jax.random.normal(next(keys), (cout,), jnp.float32)
            layer["beta"] = 0.1 * jax.random.normal(next(keys), (cout,), jnp.float32)
        torch_p["layers"].append(layer)

    # ---- packed / fused kernel parameters (all computed once, at init) ----
    fc_w_np = np.asarray(torch_p["fc_w"], np.float32)
    fc_b_np = np.asarray(torch_p["fc_b"], np.float32)

    kern_layers = []
    f = 1
    for i in range(nl):
        cout = chans[i + 1]
        fo = 2 * f
        mdiv = max(1, 128 // (fo * fo))
        cout_pad = int(-(-cout // mdiv) * mdiv)     # lane-pad: fo^2*cout_pad % 128 == 0
        pc = fo * fo * cout_pad
        entry = {"cout": cout, "cout_pad": cout_pad, "pc": pc,
                 "f_in": f, "has_bn": i < nl - 1}

        w_np = np.asarray(torch_p["layers"][i]["w"], np.float32)
        b_np = np.asarray(torch_p["layers"][i]["b"], np.float32)
        if i == 0:
            W, b = _fold_fc_conv1(fc_w_np, fc_b_np, w_np, b_np, c0, s, cout_pad)
        else:
            cin_pad = kern_layers[i - 1]["cout_pad"]
            W, b = _pack_convt(w_np, b_np, f, cin_pad, cout_pad)
        entry["w"] = jnp.asarray(W, jnp.bfloat16)   # bf16: halves weight DMA
        entry["b"] = jnp.asarray(b, jnp.float32)

        if entry["has_bn"]:
            reps = (s * s * fo * fo) if i == 0 else (fo * fo)
            assert reps & (reps - 1) == 0, "phase-block count must be a power of two"
            g = np.zeros((cout_pad,), np.float32)
            g[:cout] = np.asarray(torch_p["layers"][i]["gamma"], np.float32)
            be = np.zeros((cout_pad,), np.float32)
            be[:cout] = np.asarray(torch_p["layers"][i]["beta"], np.float32)
            entry["gamma"] = jnp.asarray(np.tile(g, reps).reshape(1, -1))
            entry["beta"] = jnp.asarray(np.tile(be, reps).reshape(1, -1))

        kern_layers.append(entry)
        f *= 2

    return {
        "torch": torch_p,
        "s": s, "c0": c0, "f_out": f, "out_channels": output_channels,
        "layers": kern_layers,
    }


# ------------------------------ forward passes ---------------------------------

def decoder_forward(z, p):
    batch = z.shape[0]
    s = p["s"]
    layers = p["layers"]
    meta = [{"cout_pad": l["cout_pad"], "pc": l["pc"], "has_bn": l["has_bn"]}
            for l in layers]
    kernel = _build_kernel(batch, s, meta)

    inputs = [z]
    for l in layers:
        inputs += [l["w"], l["b"]]
        if l["has_bn"]:
            inputs += [l["gamma"], l["beta"]]

    m = s * s * batch
    pc_last = layers[-1]["pc"]

    # Single fused kernel: weights ~0.4 MiB bf16 + activations <1.5 MiB, all
    # VMEM-resident; matmul M = s*s*batch (=128 for batch=32), N multiples of 128.
    out2d = pl.pallas_call(
        kernel,
        out_shape=jax.ShapeDtypeStruct((m, pc_last), jnp.float32),
        in_specs=[_vmem()] * len(inputs),
        out_specs=_vmem(),
    )(*inputs)

    # Final depth-to-space unpack + NCHW: rows are (i, j, b), cols are (vy, vx, c_pad).
    f_out = p["f_out"]
    cp = layers[-1]["cout_pad"]
    cout = p["out_channels"]
    out6 = out2d.reshape(s, s, batch, f_out, f_out, cp)[..., :cout]
    img = jnp.transpose(out6, (2, 5, 0, 3, 1, 4)).reshape(
        batch, cout, s * f_out, s * f_out)
    return img


def decoder_reference(z, p):
    # Pure-JAX (XLA) reference mirroring the torch module, for verification.
    tp = p["torch"]
    s, c0 = p["s"], p["c0"]
    batch = z.shape[0]
    x = z @ tp["fc_w"].T + tp["fc_b"]
    x = x.reshape(batch, c0, s, s)                 # torch .view (NCHW)
    x = jnp.transpose(x, (0, 2, 3, 1))             # NHWC for lax.conv
    nl = len(tp["layers"])
    for i, layer in enumerate(tp["layers"]):
        # ConvTranspose2d(k=3,s=2,p=1,op=1) == lhs-dilated conv with flipped weight.
        w = jnp.transpose(layer["w"][:, :, ::-1, ::-1], (2, 3, 0, 1))   # HWIO
        y = jax.lax.conv_general_dilated(
            x, w, window_strides=(1, 1), padding=((1, 2), (1, 2)),
            lhs_dilation=(2, 2), dimension_numbers=("NHWC", "HWIO", "NHWC"),
            precision=jax.lax.Precision.HIGHEST) + layer["b"]
        if i < nl - 1:
            mean = jnp.mean(y, axis=(0, 1, 2), keepdims=True)
            var = jnp.mean((y - mean) ** 2, axis=(0, 1, 2), keepdims=True)
            y = (y - mean) * jax.lax.rsqrt(var + BN_EPS)
            y = layer["gamma"] * y + layer["beta"]
            y = jnp.where(y >= 0, y, LEAKY_SLOPE * y)
        else:
            y = jnp.tanh(y)
        x = y
    return jnp.transpose(x, (0, 3, 1, 2))


if __name__ == "__main__":
    # Shapes consistent with the module structure:
    # latent_dim=32, hidden_dims=[32,16,8], image_size=16 -> initial spatial 2,
    # upsampled 2 -> 4 -> 8 -> 16; output (B, 3, 16, 16).
    # batch=32 so the conv matmuls see M = s*s*B = 128 rows (per the perf review).
    latent_dim, output_channels, hidden_dims, image_size = 32, 3, [32, 16, 8], 16
    batch = 32

    key = jax.random.PRNGKey(0)
    kz, kp = jax.random.split(key)
    z = jax.random.normal(kz, (batch, latent_dim), jnp.float32)
    params = init_params(kp, latent_dim, output_channels, hidden_dims, image_size)

    fwd = jax.jit(lambda zz: decoder_forward(zz, params))
    out = jax.block_until_ready(fwd(z))
    assert out.shape == (batch, output_channels, image_size, image_size), out.shape

    ref = jax.block_until_ready(decoder_reference(z, params))
    # Kernel matmuls use explicit bf16 operands with f32 accumulation (per perf
    # feedback); the reference uses Precision.HIGHEST, hence the tolerance.
    err = float(jnp.max(jnp.abs(out - ref)))
    assert jnp.allclose(out, ref, atol=3e-2, rtol=3e-2), err

    print("KERNEL_OK")
</pallas_src>

<mosaic_0001>
module attributes {stable_mosaic.version = 11 : i64} {
  func.func @kernel(%arg0: memref<32x32xf32, #tpu.memory_space<vmem>>, %arg1: memref<32x512xbf16, #tpu.memory_space<vmem>>, %arg2: memref<1x512xf32, #tpu.memory_space<vmem>>, %arg3: memref<1x512xf32, #tpu.memory_space<vmem>>, %arg4: memref<1x512xf32, #tpu.memory_space<vmem>>, %arg5: memref<512x128xbf16, #tpu.memory_space<vmem>>, %arg6: memref<1x128xf32, #tpu.memory_space<vmem>>, %arg7: memref<1x128xf32, #tpu.memory_space<vmem>>, %arg8: memref<1x128xf32, #tpu.memory_space<vmem>>, %arg9: memref<512x256xbf16, #tpu.memory_space<vmem>>, %arg10: memref<1x256xf32, #tpu.memory_space<vmem>>, %arg11: memref<128x256xf32, #tpu.memory_space<vmem>>) attributes {dimension_semantics = [], scalar_prefetch = 0 : i64, scratch_operands = 0 : i64, tpu.core_type = #tpu.core_type<tc>} {
    %c0 = arith.constant 0 : index
    %c0_0 = arith.constant 0 : index
    %0 = vector.load %arg0[%c0, %c0_0] : memref<32x32xf32, #tpu.memory_space<vmem>>, vector<32x32xf32>
    %1 = arith.truncf %0 : vector<32x32xf32> to vector<32x32xbf16>
    %c0_1 = arith.constant 0 : index
    %c0_2 = arith.constant 0 : index
    %2 = vector.load %arg1[%c0_1, %c0_2] : memref<32x512xbf16, #tpu.memory_space<vmem>>, vector<32x512xbf16>
    %cst = arith.constant dense<0.000000e+00> : vector<32x512xf32>
    %3 = tpu.matmul %1, %2, %cst {dimension_numbers = #tpu.dot_dimension_numbers<[1], [0], [0], [1], [0, 0, 1, 1], [], []>} : vector<32x32xbf16>, vector<32x512xbf16>, vector<32x512xf32> -> vector<32x512xf32>
    %c0_3 = arith.constant 0 : index
    %c0_4 = arith.constant 0 : index
    %4 = vector.load %arg2[%c0_3, %c0_4] : memref<1x512xf32, #tpu.memory_space<vmem>>, vector<1x512xf32>
    %5 = vector.broadcast %4 : vector<1x512xf32> to vector<32x512xf32>
    %6 = arith.addf %3, %5 : vector<32x512xf32>
    %c0_5 = arith.constant 0 : index
    %c0_6 = arith.constant 0 : index
    %7 = vector.load %arg3[%c0_5, %c0_6] : memref<1x512xf32, #tpu.memory_space<vmem>>, vector<1x512xf32>
    %c0_7 = arith.constant 0 : index
    %c0_8 = arith.constant 0 : index
    %8 = vector.load %arg4[%c0_7, %c0_8] : memref<1x512xf32, #tpu.memory_space<vmem>>, vector<1x512xf32>
    %cst_9 = arith.constant dense<0.000000e+00> : vector<512xf32>
    %9 = vector.multi_reduction <add>, %6, %cst_9 [0] : vector<32x512xf32> to vector<512xf32>
    %10 = vector.shape_cast %9 : vector<512xf32> to vector<1x512xf32>
    %11 = arith.mulf %6, %6 : vector<32x512xf32>
    %cst_10 = arith.constant dense<0.000000e+00> : vector<512xf32>
    %12 = vector.multi_reduction <add>, %11, %cst_10 [0] : vector<32x512xf32> to vector<512xf32>
    %13 = vector.shape_cast %12 : vector<512xf32> to vector<1x512xf32>
    %c32_i32 = arith.constant 32 : i32
    %14 = tpu.dynamic_rotate %10 by %c32_i32 dim 1 : vector<1x512xf32>, i32 -> vector<1x512xf32>
    %15 = arith.addf %10, %14 : vector<1x512xf32>
    %c64_i32 = arith.constant 64 : i32
    %16 = tpu.dynamic_rotate %15 by %c64_i32 dim 1 : vector<1x512xf32>, i32 -> vector<1x512xf32>
    %17 = arith.addf %15, %16 : vector<1x512xf32>
    %c128_i32 = arith.constant 128 : i32
    %18 = tpu.dynamic_rotate %17 by %c128_i32 dim 1 : vector<1x512xf32>, i32 -> vector<1x512xf32>
    %19 = arith.addf %17, %18 : vector<1x512xf32>
    %c256_i32 = arith.constant 256 : i32
    %20 = tpu.dynamic_rotate %19 by %c256_i32 dim 1 : vector<1x512xf32>, i32 -> vector<1x512xf32>
    %21 = arith.addf %19, %20 : vector<1x512xf32>
    %cst_11 = arith.constant 0.001953125 : f32
    %22 = vector.broadcast %cst_11 : f32 to vector<1x512xf32>
    %23 = arith.mulf %21, %22 : vector<1x512xf32>
    %c32_i32_12 = arith.constant 32 : i32
    %24 = tpu.dynamic_rotate %13 by %c32_i32_12 dim 1 : vector<1x512xf32>, i32 -> vector<1x512xf32>
    %25 = arith.addf %13, %24 : vector<1x512xf32>
    %c64_i32_13 = arith.constant 64 : i32
    %26 = tpu.dynamic_rotate %25 by %c64_i32_13 dim 1 : vector<1x512xf32>, i32 -> vector<1x512xf32>
    %27 = arith.addf %25, %26 : vector<1x512xf32>
    %c128_i32_14 = arith.constant 128 : i32
    %28 = tpu.dynamic_rotate %27 by %c128_i32_14 dim 1 : vector<1x512xf32>, i32 -> vector<1x512xf32>
    %29 = arith.addf %27, %28 : vector<1x512xf32>
    %c256_i32_15 = arith.constant 256 : i32
    %30 = tpu.dynamic_rotate %29 by %c256_i32_15 dim 1 : vector<1x512xf32>, i32 -> vector<1x512xf32>
    %31 = arith.addf %29, %30 : vector<1x512xf32>
    %cst_16 = arith.constant 0.001953125 : f32
    %32 = vector.broadcast %cst_16 : f32 to vector<1x512xf32>
    %33 = arith.mulf %31, %32 : vector<1x512xf32>
    %34 = arith.mulf %23, %23 : vector<1x512xf32>
    %35 = arith.subf %33, %34 : vector<1x512xf32>
    %cst_17 = arith.constant 9.99999974E-6 : f32
    %36 = vector.broadcast %cst_17 : f32 to vector<1x512xf32>
    %37 = arith.addf %35, %36 : vector<1x512xf32>
    %38 = math.rsqrt %37 : vector<1x512xf32>
    %39 = arith.mulf %7, %38 : vector<1x512xf32>
    %40 = arith.mulf %23, %39 : vector<1x512xf32>
    %41 = arith.subf %8, %40 : vector<1x512xf32>
    %42 = vector.broadcast %39 : vector<1x512xf32> to vector<32x512xf32>
    %43 = arith.mulf %6, %42 : vector<32x512xf32>
    %44 = vector.broadcast %41 : vector<1x512xf32> to vector<32x512xf32>
    %45 = arith.addf %43, %44 : vector<32x512xf32>
    %cst_18 = arith.constant 0.00999999977 : f32
    %46 = vector.broadcast %cst_18 : f32 to vector<32x512xf32>
    %47 = arith.mulf %46, %45 : vector<32x512xf32>
    %48 = arith.maximumf %45, %47 : vector<32x512xf32>
    %49 = arith.truncf %48 : vector<32x512xf32> to vector<32x512xbf16>
    %cst_19 = arith.constant 0.000000e+00 : bf16
    %50 = vector.broadcast %cst_19 : bf16 to vector<32x128xbf16>
    %51 = vector.extract_strided_slice %49 {offsets = [0, 0], sizes = [32, 128], strides = [1, 1]} : vector<32x512xbf16> to vector<32x128xbf16>
    %52 = vector.extract_strided_slice %49 {offsets = [0, 128], sizes = [32, 128], strides = [1, 1]} : vector<32x512xbf16> to vector<32x128xbf16>
    %53 = vector.extract_strided_slice %49 {offsets = [0, 256], sizes = [32, 128], strides = [1, 1]} : vector<32x512xbf16> to vector<32x128xbf16>
    %54 = vector.extract_strided_slice %49 {offsets = [0, 384], sizes = [32, 128], strides = [1, 1]} : vector<32x512xbf16> to vector<32x128xbf16>
    %55 = tpu.concatenate %51, %52, %53, %54 in 1 : vector<32x128xbf16>, vector<32x128xbf16>, vector<32x128xbf16>, vector<32x128xbf16> -> vector<32x512xbf16>
    %56 = vector.extract_strided_slice %49 {offsets = [0, 128], sizes = [32, 128], strides = [1, 1]} : vector<32x512xbf16> to vector<32x128xbf16>
    %57 = vector.extract_strided_slice %49 {offsets = [0, 384], sizes = [32, 128], strides = [1, 1]} : vector<32x512xbf16> to vector<32x128xbf16>
    %58 = tpu.concatenate %56, %50, %57, %50 in 1 : vector<32x128xbf16>, vector<32x128xbf16>, vector<32x128xbf16>, vector<32x128xbf16> -> vector<32x512xbf16>
    %59 = vector.extract_strided_slice %49 {offsets = [0, 256], sizes = [32, 128], strides = [1, 1]} : vector<32x512xbf16> to vector<32x128xbf16>
    %60 = vector.extract_strided_slice %49 {offsets = [0, 384], sizes = [32, 128], strides = [1, 1]} : vector<32x512xbf16> to vector<32x128xbf16>
    %61 = tpu.concatenate %59, %60, %50, %50 in 1 : vector<32x128xbf16>, vector<32x128xbf16>, vector<32x128xbf16>, vector<32x128xbf16> -> vector<32x512xbf16>
    %62 = vector.extract_strided_slice %49 {offsets = [0, 384], sizes = [32, 128], strides = [1, 1]} : vector<32x512xbf16> to vector<32x128xbf16>
    %63 = tpu.concatenate %62, %50, %50, %50 in 1 : vector<32x128xbf16>, vector<32x128xbf16>, vector<32x128xbf16>, vector<32x128xbf16> -> vector<32x512xbf16>
    %64 = tpu.concatenate %55, %58, %61, %63 in 0 : vector<32x512xbf16>, vector<32x512xbf16>, vector<32x512xbf16>, vector<32x512xbf16> -> vector<128x512xbf16>
    %c0_20 = arith.constant 0 : index
    %c0_21 = arith.constant 0 : index
    %65 = vector.load %arg5[%c0_20, %c0_21] : memref<512x128xbf16, #tpu.memory_space<vmem>>, vector<512x128xbf16>
    %cst_22 = arith.constant dense<0.000000e+00> : vector<128x128xf32>
    %66 = tpu.matmul %64, %65, %cst_22 {dimension_numbers = #tpu.dot_dimension_numbers<[1], [0], [0], [1], [0, 0, 1, 1], [], []>} : vector<128x512xbf16>, vector<512x128xbf16>, vector<128x128xf32> -> vector<128x128xf32>
    %c0_23 = arith.constant 0 : index
    %c0_24 = arith.constant 0 : index
    %67 = vector.load %arg6[%c0_23, %c0_24] : memref<1x128xf32, #tpu.memory_space<vmem>>, vector<1x128xf32>
    %68 = vector.broadcast %67 : vector<1x128xf32> to vector<128x128xf32>
    %69 = arith.addf %66, %68 : vector<128x128xf32>
    %c0_25 = arith.constant 0 : index
    %c0_26 = arith.constant 0 : index
    %70 = vector.load %arg7[%c0_25, %c0_26] : memref<1x128xf32, #tpu.memory_space<vmem>>, vector<1x128xf32>
    %c0_27 = arith.constant 0 : index
    %c0_28 = arith.constant 0 : index
    %71 = vector.load %arg8[%c0_27, %c0_28] : memref<1x128xf32, #tpu.memory_space<vmem>>, vector<1x128xf32>
    %cst_29 = arith.constant dense<0.000000e+00> : vector<128xf32>
    %72 = vector.multi_reduction <add>, %69, %cst_29 [0] : vector<128x128xf32> to vector<128xf32>
    %73 = vector.shape_cast %72 : vector<128xf32> to vector<1x128xf32>
    %74 = arith.mulf %69, %69 : vector<128x128xf32>
    %cst_30 = arith.constant dense<0.000000e+00> : vector<128xf32>
    %75 = vector.multi_reduction <add>, %74, %cst_30 [0] : vector<128x128xf32> to vector<128xf32>
    %76 = vector.shape_cast %75 : vector<128xf32> to vector<1x128xf32>
    %c8_i32 = arith.constant 8 : i32
    %77 = tpu.dynamic_rotate %73 by %c8_i32 dim 1 : vector<1x128xf32>, i32 -> vector<1x128xf32>
    %78 = arith.addf %73, %77 : vector<1x128xf32>
    %c16_i32 = arith.constant 16 : i32
    %79 = tpu.dynamic_rotate %78 by %c16_i32 dim 1 : vector<1x128xf32>, i32 -> vector<1x128xf32>
    %80 = arith.addf %78, %79 : vector<1x128xf32>
    %c32_i32_31 = arith.constant 32 : i32
    %81 = tpu.dynamic_rotate %80 by %c32_i32_31 dim 1 : vector<1x128xf32>, i32 -> vector<1x128xf32>
    %82 = arith.addf %80, %81 : vector<1x128xf32>
    %c64_i32_32 = arith.constant 64 : i32
    %83 = tpu.dynamic_rotate %82 by %c64_i32_32 dim 1 : vector<1x128xf32>, i32 -> vector<1x128xf32>
    %84 = arith.addf %82, %83 : vector<1x128xf32>
    %cst_33 = arith.constant 4.8828125E-4 : f32
    %85 = vector.broadcast %cst_33 : f32 to vector<1x128xf32>
    %86 = arith.mulf %84, %85 : vector<1x128xf32>
    %c8_i32_34 = arith.constant 8 : i32
    %87 = tpu.dynamic_rotate %76 by %c8_i32_34 dim 1 : vector<1x128xf32>, i32 -> vector<1x128xf32>
    %88 = arith.addf %76, %87 : vector<1x128xf32>
    %c16_i32_35 = arith.constant 16 : i32
    %89 = tpu.dynamic_rotate %88 by %c16_i32_35 dim 1 : vector<1x128xf32>, i32 -> vector<1x128xf32>
    %90 = arith.addf %88, %89 : vector<1x128xf32>
    %c32_i32_36 = arith.constant 32 : i32
    %91 = tpu.dynamic_rotate %90 by %c32_i32_36 dim 1 : vector<1x128xf32>, i32 -> vector<1x128xf32>
    %92 = arith.addf %90, %91 : vector<1x128xf32>
    %c64_i32_37 = arith.constant 64 : i32
    %93 = tpu.dynamic_rotate %92 by %c64_i32_37 dim 1 : vector<1x128xf32>, i32 -> vector<1x128xf32>
    %94 = arith.addf %92, %93 : vector<1x128xf32>
    %cst_38 = arith.constant 4.8828125E-4 : f32
    %95 = vector.broadcast %cst_38 : f32 to vector<1x128xf32>
    %96 = arith.mulf %94, %95 : vector<1x128xf32>
    %97 = arith.mulf %86, %86 : vector<1x128xf32>
    %98 = arith.subf %96, %97 : vector<1x128xf32>
    %cst_39 = arith.constant 9.99999974E-6 : f32
    %99 = vector.broadcast %cst_39 : f32 to vector<1x128xf32>
    %100 = arith.addf %98, %99 : vector<1x128xf32>
    %101 = math.rsqrt %100 : vector<1x128xf32>
    %102 = arith.mulf %70, %101 : vector<1x128xf32>
    %103 = arith.mulf %86, %102 : vector<1x128xf32>
    %104 = arith.subf %71, %103 : vector<1x128xf32>
    %105 = vector.broadcast %102 : vector<1x128xf32> to vector<128x128xf32>
    %106 = arith.mulf %69, %105 : vector<128x128xf32>
    %107 = vector.broadcast %104 : vector<1x128xf32> to vector<128x128xf32>
    %108 = arith.addf %106, %107 : vector<128x128xf32>
    %cst_40 = arith.constant 0.00999999977 : f32
    %109 = vector.broadcast %cst_40 : f32 to vector<128x128xf32>
    %110 = arith.mulf %109, %108 : vector<128x128xf32>
    %111 = arith.maximumf %108, %110 : vector<128x128xf32>
    %112 = arith.truncf %111 : vector<128x128xf32> to vector<128x128xbf16>
    %cst_41 = arith.constant 0.000000e+00 : bf16
    %113 = vector.broadcast %cst_41 : bf16 to vector<32x128xbf16>
    %114 = vector.extract_strided_slice %112 {offsets = [0, 0], sizes = [32, 128], strides = [1, 1]} : vector<128x128xbf16> to vector<32x128xbf16>
    %115 = vector.extract_strided_slice %112 {offsets = [32, 0], sizes = [32, 128], strides = [1, 1]} : vector<128x128xbf16> to vector<32x128xbf16>
    %116 = vector.extract_strided_slice %112 {offsets = [64, 0], sizes = [32, 128], strides = [1, 1]} : vector<128x128xbf16> to vector<32x128xbf16>
    %117 = vector.extract_strided_slice %112 {offsets = [96, 0], sizes = [32, 128], strides = [1, 1]} : vector<128x128xbf16> to vector<32x128xbf16>
    %118 = tpu.concatenate %114, %115, %116, %117 in 1 : vector<32x128xbf16>, vector<32x128xbf16>, vector<32x128xbf16>, vector<32x128xbf16> -> vector<32x512xbf16>
    %119 = vector.extract_strided_slice %112 {offsets = [32, 0], sizes = [32, 128], strides = [1, 1]} : vector<128x128xbf16> to vector<32x128xbf16>
    %120 = vector.extract_strided_slice %112 {offsets = [96, 0], sizes = [32, 128], strides = [1, 1]} : vector<128x128xbf16> to vector<32x128xbf16>
    %121 = tpu.concatenate %119, %113, %120, %113 in 1 : vector<32x128xbf16>, vector<32x128xbf16>, vector<32x128xbf16>, vector<32x128xbf16> -> vector<32x512xbf16>
    %122 = vector.extract_strided_slice %112 {offsets = [64, 0], sizes = [32, 128], strides = [1, 1]} : vector<128x128xbf16> to vector<32x128xbf16>
    %123 = vector.extract_strided_slice %112 {offsets = [96, 0], sizes = [32, 128], strides = [1, 1]} : vector<128x128xbf16> to vector<32x128xbf16>
    %124 = tpu.concatenate %122, %123, %113, %113 in 1 : vector<32x128xbf16>, vector<32x128xbf16>, vector<32x128xbf16>, vector<32x128xbf16> -> vector<32x512xbf16>
    %125 = vector.extract_strided_slice %112 {offsets = [96, 0], sizes = [32, 128], strides = [1, 1]} : vector<128x128xbf16> to vector<32x128xbf16>
    %126 = tpu.concatenate %125, %113, %113, %113 in 1 : vector<32x128xbf16>, vector<32x128xbf16>, vector<32x128xbf16>, vector<32x128xbf16> -> vector<32x512xbf16>
    %127 = tpu.concatenate %118, %121, %124, %126 in 0 : vector<32x512xbf16>, vector<32x512xbf16>, vector<32x512xbf16>, vector<32x512xbf16> -> vector<128x512xbf16>
    %c0_42 = arith.constant 0 : index
    %c0_43 = arith.constant 0 : index
    %128 = vector.load %arg9[%c0_42, %c0_43] : memref<512x256xbf16, #tpu.memory_space<vmem>>, vector<512x256xbf16>
    %cst_44 = arith.constant dense<0.000000e+00> : vector<128x256xf32>
    %129 = tpu.matmul %127, %128, %cst_44 {dimension_numbers = #tpu.dot_dimension_numbers<[1], [0], [0], [1], [0, 0, 1, 1], [], []>} : vector<128x512xbf16>, vector<512x256xbf16>, vector<128x256xf32> -> vector<128x256xf32>
    %c0_45 = arith.constant 0 : index
    %c0_46 = arith.constant 0 : index
    %130 = vector.load %arg10[%c0_45, %c0_46] : memref<1x256xf32, #tpu.memory_space<vmem>>, vector<1x256xf32>
    %131 = vector.broadcast %130 : vector<1x256xf32> to vector<128x256xf32>
    %132 = arith.addf %129, %131 : vector<128x256xf32>
    %133 = math.tanh %132 : vector<128x256xf32>
    %c0_47 = arith.constant 0 : index
    %c0_48 = arith.constant 0 : index
    %134 = vector.load %arg11[%c0_47, %c0_48] : memref<128x256xf32, #tpu.memory_space<vmem>>, vector<128x256xf32>
    tpu.vector_store %arg11[%c0_47, %c0_48], %133 {strides = array<i32>} : memref<128x256xf32, #tpu.memory_space<vmem>>, vector<128x256xf32>,
    return
  }
}

</mosaic_0001>

<llo_original>
// kernel: _lambda_.1
$region0: #{_lambda_.1}
  #allocation0 [shape = 'u32[]', space=smem, size = 0x4, offset = 0x4, fixed_abs, tag = 'smem constant byte address 0x4 - core index']
  #allocation1 [shape = 'u32[144,128]{1,0:T(1,128)}', space=vmem, size = 0x12000, scoped, tag = 'internal scratch']
  %s0 = inlined_call_operand.hbm [shape: f32[32,32], index: 0, kind: input, shape index: {}]
  %s1 = inlined_call_operand.hbm [shape: bf16[32,512], index: 1, kind: input, shape index: {}]
  %s2 = inlined_call_operand.hbm [shape: f32[1,512], index: 2, kind: input, shape index: {}]
  %s3 = inlined_call_operand.hbm [shape: f32[1,512], index: 3, kind: input, shape index: {}]
  %s4 = inlined_call_operand.vmem [shape: f32[1,512], index: 4, kind: input, shape index: {}]
  %s5 = inlined_call_operand.hbm [shape: bf16[512,128], index: 5, kind: input, shape index: {}]
  %s6 = inlined_call_operand.vmem [shape: f32[1,128], index: 6, kind: input, shape index: {}]
  %s7 = inlined_call_operand.vmem [shape: f32[1,128], index: 7, kind: input, shape index: {}]
  %s8 = inlined_call_operand.vmem [shape: f32[1,128], index: 8, kind: input, shape index: {}]
  %s9 = inlined_call_operand.hbm [shape: bf16[512,256], index: 9, kind: input, shape index: {}]
  %s10 = inlined_call_operand.vmem [shape: f32[1,256], index: 10, kind: input, shape index: {}]
  %s11 = inlined_call_operand.vmem [shape: f32[128,256], index: 11, kind: output, shape index: {}]
  %s12 = sld [smem:[#allocation0]]
  $region78: #{_lambda_.1} parent=0
    _
  %s14 = ssub.s32 1, %s12
  %s15 = scalar_select 0, %s14, %s12
  $region1: #{_lambda_.1} parent=0
    #allocation2 [shape = 'u8[16384]{0}', space=vmem, size = 0x4000, scoped, tag = 'input window, operand 0, single buffered']
    #allocation3 [shape = 's32[1]{0}', space=sflag, size = 0x4, scoped, tag = 'scoped memory for _lambda_.1']
    #allocation4 [shape = 'u8[32768]{0}', space=vmem, size = 0x8000, scoped, tag = 'input window, operand 1, single buffered']
    #allocation5 [shape = 's32[1]{0}', space=sflag, size = 0x4, scoped, tag = 'scoped memory for _lambda_.1']
    #allocation6 [shape = 'u8[2048]{0}', space=vmem, size = 0x800, scoped, tag = 'input window, operand 2, single buffered']
    #allocation7 [shape = 'u8[2048]{0}', space=vmem, size = 0x800, scoped, tag = 'input window, operand 3, single buffered']
    #allocation8 [shape = 's32[1]{0}', space=sflag, size = 0x4, scoped, tag = 'scoped memory for _lambda_.1']
    #allocation9 [shape = 'u8[131072]{0}', space=vmem, size = 0x20000, scoped, tag = 'input window, operand 5, single buffered']
    #allocation10 [shape = 'u8[262144]{0}', space=vmem, size = 0x40000, scoped, tag = 'input window, operand 9, single buffered']
    #allocation11 [shape = 's32[1]{0}', space=sflag, size = 0x4, scoped, tag = 'scoped memory for _lambda_.1']
    %16 = vsyncpa [#allocation3], 0
    %17 = vsyncpa [#allocation5], 0
    %18 = vsyncpa [#allocation8], 0
    %19 = vsyncpa [#allocation11], 0
    // Predicated region
    $region2: #{_lambda_.1} parent=1 // pred_check
      _
    $region3: #{_lambda_.1} parent=1 // pred_check_branch
      %21 = sbr.rel (0) target = $region5
    $region4: #{_lambda_.1} parent=1 // pred_region
      %s23 = ssub.s32 512, 512
      %24 = vsyncadd [#allocation3], %s23
      %s25 = sshll.u32 [#allocation2], 4
      %s26 = int_to_ptr.vmem [resolvable:$true] %s25
      %31 = dma.hbm_to_vmem [thread:$0]  %s0, 512, %s26, [#allocation3], 128, 128, 8
    $region5: #{_lambda_.1} parent=1 // pred_fallthru
      _
    // Predicated region
    $region6: #{_lambda_.1} parent=1 // pred_check
      _
    $region7: #{_lambda_.1} parent=1 // pred_check_branch
      %33 = sbr.rel (0) target = $region9
    $region8: #{_lambda_.1} parent=1 // pred_region
      %s35 = ssub.s32 1024, 1024
      %36 = vsyncadd [#allocation5], %s35
      %s37 = sshll.u32 [#allocation4], 4
      %s38 = int_to_ptr.vmem [resolvable:$true] %s37
      %43 = dma.hbm_to_vmem [thread:$0]  %s1, 1024, %s38, [#allocation5], 256, 256, 16
    $region9: #{_lambda_.1} parent=1 // pred_fallthru
      _
    // Predicated region
    $region10: #{_lambda_.1} parent=1 // pred_check
      _
    $region11: #{_lambda_.1} parent=1 // pred_check_branch
      %45 = sbr.rel (0) target = $region13
    $region12: #{_lambda_.1} parent=1 // pred_region
      %s47 = ssub.s32 64, 64
      %48 = vsyncadd [#allocation5], %s47
      %s50 = sshll.u32 [#allocation6], 4
      %s51 = int_to_ptr.vmem [resolvable:$true] %s50
      %53 = dma.hbm_to_vmem [thread:$0]  %s2, 64, %s51, [#allocation5]
    $region13: #{_lambda_.1} parent=1 // pred_fallthru
      _
    // Predicated region
    $region14: #{_lambda_.1} parent=1 // pred_check
      _
    $region15: #{_lambda_.1} parent=1 // pred_check_branch
      %55 = sbr.rel (0) target = $region17
    $region16: #{_lambda_.1} parent=1 // pred_region
      %s57 = ssub.s32 64, 64
      %58 = vsyncadd [#allocation8], %s57
      %s60 = sshll.u32 [#allocation7], 4
      %s61 = int_to_ptr.vmem [resolvable:$true] %s60
      %63 = dma.hbm_to_vmem [thread:$0]  %s3, 64, %s61, [#allocation8]
    $region17: #{_lambda_.1} parent=1 // pred_fallthru
      _
    // Predicated region
    $region18: #{_lambda_.1} parent=1 // pred_check
      _
    $region19: #{_lambda_.1} parent=1 // pred_check_branch
      %65 = sbr.rel (0) target = $region21
    $region20: #{_lambda_.1} parent=1 // pred_region
      _
    $region21: #{_lambda_.1} parent=1 // pred_fallthru
      _
    // Predicated region
    $region22: #{_lambda_.1} parent=1 // pred_check
      _
    $region23: #{_lambda_.1} parent=1 // pred_check_branch
      %67 = sbr.rel (0) target = $region25
    $region24: #{_lambda_.1} parent=1 // pred_region
      %s69 = ssub.s32 4096, 4096
      %70 = vsyncadd [#allocation8], %s69
      %s71 = sshll.u32 [#allocation9], 4
      %s72 = int_to_ptr.vmem [resolvable:$true] %s71
      %77 = dma.hbm_to_vmem [thread:$0]  %s5, 4096, %s72, [#allocation8], 64, 64, 4
    $region25: #{_lambda_.1} parent=1 // pred_fallthru
      _
    // Predicated region
    $region26: #{_lambda_.1} parent=1 // pred_check
      _
    $region27: #{_lambda_.1} parent=1 // pred_check_branch
      %79 = sbr.rel (0) target = $region29
    $region28: #{_lambda_.1} parent=1 // pred_region
      _
    $region29: #{_lambda_.1} parent=1 // pred_fallthru
      _
    // Predicated region
    $region30: #{_lambda_.1} parent=1 // pred_check
      _
    $region31: #{_lambda_.1} parent=1 // pred_check_branch
      %81 = sbr.rel (0) target = $region33
    $region32: #{_lambda_.1} parent=1 // pred_region
      _
    $region33: #{_lambda_.1} parent=1 // pred_fallthru
      _
    // Predicated region
    $region34: #{_lambda_.1} parent=1 // pred_check
      _
    $region35: #{_lambda_.1} parent=1 // pred_check_branch
      %83 = sbr.rel (0) target = $region37
    $region36: #{_lambda_.1} parent=1 // pred_region
      _
    $region37: #{_lambda_.1} parent=1 // pred_fallthru
      _
    // Predicated region
    $region38: #{_lambda_.1} parent=1 // pred_check
      _
    $region39: #{_lambda_.1} parent=1 // pred_check_branch
      %85 = sbr.rel (0) target = $region41
    $region40: #{_lambda_.1} parent=1 // pred_region
      %s87 = ssub.s32 8192, 8192
      %88 = vsyncadd [#allocation11], %s87
      %s89 = sshll.u32 [#allocation10], 4
      %s90 = int_to_ptr.vmem [resolvable:$true] %s89
      %95 = dma.hbm_to_vmem [thread:$0]  %s9, 8192, %s90, [#allocation11], 128, 128, 8
    $region41: #{_lambda_.1} parent=1 // pred_fallthru
      _
    // Predicated region
    $region42: #{_lambda_.1} parent=1 // pred_check
      _
    $region43: #{_lambda_.1} parent=1 // pred_check_branch
      %97 = sbr.rel (0) target = $region45
    $region44: #{_lambda_.1} parent=1 // pred_region
      _
    $region45: #{_lambda_.1} parent=1 // pred_fallthru
      _
    // Predicated region
    $region46: #{_lambda_.1} parent=1 // pred_check
      _
    $region47: #{_lambda_.1} parent=1 // pred_check_branch
      %99 = sbr.rel (0) target = $region49
    $region48: #{_lambda_.1} parent=1 // pred_region
      %100 = dma.done [#allocation3], 512
    $region49: #{_lambda_.1} parent=1 // pred_fallthru
      _
    // Predicated region
    $region50: #{_lambda_.1} parent=1 // pred_check
      _
    $region51: #{_lambda_.1} parent=1 // pred_check_branch
      %102 = sbr.rel (0) target = $region53
    $region52: #{_lambda_.1} parent=1 // pred_region
      %103 = dma.done [#allocation5], 1024
    $region53: #{_lambda_.1} parent=1 // pred_fallthru
      _
    // Predicated region
    $region54: #{_lambda_.1} parent=1 // pred_check
      _
    $region55: #{_lambda_.1} parent=1 // pred_check_branch
      %105 = sbr.rel (0) target = $region57
    $region56: #{_lambda_.1} parent=1 // pred_region
      %106 = dma.done [#allocation5], 64
    $region57: #{_lambda_.1} parent=1 // pred_fallthru
      _
    // Predicated region
    $region58: #{_lambda_.1} parent=1 // pred_check
      _
    $region59: #{_lambda_.1} parent=1 // pred_check_branch
      %108 = sbr.rel (0) target = $region61
    $region60: #{_lambda_.1} parent=1 // pred_region
      %109 = dma.done [#allocation8], 64
    $region61: #{_lambda_.1} parent=1 // pred_fallthru
      _
    // Predicated region
    $region62: #{_lambda_.1} parent=1 // pred_check
      _
    $region63: #{_lambda_.1} parent=1 // pred_check_branch
      %111 = sbr.rel (0) target = $region65
    $region64: #{_lambda_.1} parent=1 // pred_region
      %112 = dma.done [#allocation8], 4096
    $region65: #{_lambda_.1} parent=1 // pred_fallthru
      _
    // Predicated region
    $region66: #{_lambda_.1} parent=1 // pred_check
      _
    $region67: #{_lambda_.1} parent=1 // pred_check_branch
      %114 = sbr.rel (0) target = $region69
    $region68: #{_lambda_.1} parent=1 // pred_region
      %115 = dma.done [#allocation11], 8192
    $region69: #{_lambda_.1} parent=1 // pred_fallthru
      _
    %v117 = vld [vmem:[#allocation2] sm:$0xff]
    %v118 = vld [vmem:[#allocation2 + $0x8] sm:$0xff]
    %v119 = vld [vmem:[#allocation2 + $0x10] sm:$0xff]
    %v120 = vld [vmem:[#allocation2 + $0x18] sm:$0xff]
    %v121 = vpack.c.bf16 %v118, %v117
    %v122 = vpack.c.bf16 %v120, %v119
    %v123 = vld [vmem:[#allocation4] sm:$0xff]
    %v124 = vld [vmem:[#allocation4 + $0x8] sm:$0xff]
    %v125 = vld [vmem:[#allocation4 + $0x10] sm:$0xff]
    %v126 = vld [vmem:[#allocation4 + $0x18] sm:$0xff]
    %v127 = vld [vmem:[#allocation4 + $0x20] sm:$0xff]
    %v128 = vld [vmem:[#allocation4 + $0x28] sm:$0xff]
    %v129 = vld [vmem:[#allocation4 + $0x30] sm:$0xff]
    %v130 = vld [vmem:[#allocation4 + $0x38] sm:$0xff]
    %v131 = vld [vmem:[#allocation6] sm:$0xf]
    %v133 = vlaneseq
    %v134 = vshrl.u32 %v133, 7
    %v135 = vsub.s32 0, %v134
    %v136 = vrot.slane %v131, %v135
    %v137 = vlaneseq
    %v138 = vshrl.u32 %v137, 7
    %v139 = vsub.s32 1, %v138
    %v140 = vrot.slane %v131, %v139
    %v141 = vlaneseq
    %v142 = vshrl.u32 %v141, 7
    %v143 = vsub.s32 2, %v142
    %v144 = vrot.slane %v131, %v143
    %v145 = vlaneseq
    %v146 = vshrl.u32 %v145, 7
    %v147 = vsub.s32 3, %v146
    %v148 = vrot.slane %v131, %v147
    %v161 = vunpack.c.l.b16 %v123
    %v162 = vunpack.c.h.b16 %v123
    %v163 = vunpack.c.l.b16 %v124
    %v164 = vunpack.c.h.b16 %v124
    %v165 = vunpack.c.l.b16 %v125
    %v166 = vunpack.c.h.b16 %v125
    %v167 = vunpack.c.l.b16 %v126
    %v168 = vunpack.c.h.b16 %v126
    %v169 = vunpack.c.l.b16 %v127
    %v170 = vunpack.c.h.b16 %v127
    %v171 = vunpack.c.l.b16 %v128
    %v172 = vunpack.c.h.b16 %v128
    %v173 = vunpack.c.l.b16 %v129
    %v174 = vunpack.c.h.b16 %v129
    %v175 = vunpack.c.l.b16 %v130
    %v176 = vunpack.c.h.b16 %v130
    %v177 = vpack.c.b16 %v165, %v161
    %v178 = vpack.c.b16 %v166, %v162
    %v179 = vpack.c.b16 %v167, %v163
    %v180 = vpack.c.b16 %v168, %v164
    %v181 = vpack.c.b16 %v173, %v169
    %v182 = vpack.c.b16 %v174, %v170
    %v183 = vpack.c.b16 %v175, %v171
    %v184 = vpack.c.b16 %v176, %v172
    %vm193 = vcmask 261120
    %v195 = vsel %vm193, %v121, 0
    %v198 = vsel %vm193, %v122, 0
    %200 = vmatprep.subr.bf16.mxu0 0
    %201 = vmatpush1.bf16.msra.mxu0 0
    %202 = vmatprep.subr.bf16.mxu0 0
    %203 = vmatpush1.bf16.msra.mxu0 0
    %204 = vmatprep.subr.bf16.mxu0 0
    %205 = vmatpush1.bf16.msra.mxu0 0
    %206 = vmatprep.subr.bf16.mxu0 0
    %207 = vmatpush1.bf16.msra.mxu0 0
    %208 = vmatprep.subr.bf16.mxu0 0
    %209 = vmatpush1.bf16.msra.mxu0 0
    %210 = vmatprep.subr.bf16.mxu0 0
    %211 = vmatpush1.bf16.msra.mxu0 0
    %212 = vmatprep.subr.bf16.mxu0 %v182
    %213 = vmatpush1.bf16.msra.mxu0 %v181
    %214 = vmatprep.subr.bf16.mxu0 %v178
    %215 = vmatpush1.bf16.msra.mxu0 %v177
    %216 = vmatprep.subr.bf16.mxu0 0
    %217 = vmatpush2.bf16.msra.mxu0 0
    %218 = vmatprep.subr.bf16.mxu0 0
    %219 = vmatpush2.bf16.msra.mxu0 0
    %220 = vmatprep.subr.bf16.mxu0 0
    %221 = vmatpush2.bf16.msra.mxu0 0
    %222 = vmatprep.subr.bf16.mxu0 0
    %223 = vmatpush2.bf16.msra.mxu0 0
    %224 = vmatprep.subr.bf16.mxu0 0
    %225 = vmatpush2.bf16.msra.mxu0 0
    %226 = vmatprep.subr.bf16.mxu0 0
    %227 = vmatpush2.bf16.msra.mxu0 0
    %228 = vmatprep.subr.bf16.mxu0 0
    %229 = vmatpush2.bf16.msra.mxu0 0
    %230 = vmatprep.subr.bf16.mxu0 0
    %231 = vmatpush2.bf16.msra.mxu0 0
    %232 = vmatprep.mubr.bf16.mxu0 0
    %233 = vmatmul.mubr.bf16.gmra.mxu0 %v195
    %v234 = vpop.f32.mrf.mxu0
    %v235 = vadd.f32 %v136, %v234
    %v236 = vpop.f32.mrf.mxu0
    %v237 = vadd.f32 %v140, %v236
    %v238 = vpop.f32.mrf.mxu0
    %v239 = vadd.f32 %v136, %v238
    %v240 = vpop.f32.mrf.mxu0
    %v241 = vadd.f32 %v140, %v240
    %242 = vmatprep.mubr.bf16.mxu0 0
    %243 = vmatmul.mubr.bf16.gmra.mxu0 %v198
    %v244 = vpop.f32.mrf.mxu0
    %v245 = vadd.f32 %v136, %v244
    %v246 = vpop.f32.mrf.mxu0
    %v247 = vadd.f32 %v140, %v246
    %v248 = vpop.f32.mrf.mxu0
    %v249 = vadd.f32 %v136, %v248
    %v250 = vpop.f32.mrf.mxu0
    %v251 = vadd.f32 %v140, %v250
    %252 = vdwg.mxu0
    %253 = vmatprep.subr.bf16.mxu0 0
    %254 = vmatpush1.bf16.msra.mxu0 0
    %255 = vmatprep.subr.bf16.mxu0 0
    %256 = vmatpush1.bf16.msra.mxu0 0
    %257 = vmatprep.subr.bf16.mxu0 0
    %258 = vmatpush1.bf16.msra.mxu0 0
    %259 = vmatprep.subr.bf16.mxu0 0
    %260 = vmatpush1.bf16.msra.mxu0 0
    %261 = vmatprep.subr.bf16.mxu0 0
    %262 = vmatpush1.bf16.msra.mxu0 0
    %263 = vmatprep.subr.bf16.mxu0 0
    %264 = vmatpush1.bf16.msra.mxu0 0
    %265 = vmatprep.subr.bf16.mxu0 %v184
    %266 = vmatpush1.bf16.msra.mxu0 %v183
    %267 = vmatprep.subr.bf16.mxu0 %v180
    %268 = vmatpush1.bf16.msra.mxu0 %v179
    %269 = vmatprep.subr.bf16.mxu0 0
    %270 = vmatpush2.bf16.msra.mxu0 0
    %271 = vmatprep.subr.bf16.mxu0 0
    %272 = vmatpush2.bf16.msra.mxu0 0
    %273 = vmatprep.subr.bf16.mxu0 0
    %274 = vmatpush2.bf16.msra.mxu0 0
    %275 = vmatprep.subr.bf16.mxu0 0
    %276 = vmatpush2.bf16.msra.mxu0 0
    %277 = vmatprep.subr.bf16.mxu0 0
    %278 = vmatpush2.bf16.msra.mxu0 0
    %279 = vmatprep.subr.bf16.mxu0 0
    %280 = vmatpush2.bf16.msra.mxu0 0
    %281 = vmatprep.subr.bf16.mxu0 0
    %282 = vmatpush2.bf16.msra.mxu0 0
    %283 = vmatprep.subr.bf16.mxu0 0
    %284 = vmatpush2.bf16.msra.mxu0 0
    %285 = vmatprep.mubr.bf16.mxu0 0
    %286 = vmatmul.mubr.bf16.gmra.mxu0 %v195
    %v287 = vpop.f32.mrf.mxu0
    %v288 = vadd.f32 %v144, %v287
    %v289 = vpop.f32.mrf.mxu0
    %v290 = vadd.f32 %v148, %v289
    %v291 = vpop.f32.mrf.mxu0
    %v292 = vadd.f32 %v144, %v291
    %v293 = vpop.f32.mrf.mxu0
    %v294 = vadd.f32 %v148, %v293
    %295 = vmatprep.mubr.bf16.mxu0 0
    %296 = vmatmul.mubr.bf16.gmra.mxu0 %v198
    %v297 = vpop.f32.mrf.mxu0
    %v298 = vadd.f32 %v144, %v297
    %v299 = vpop.f32.mrf.mxu0
    %v300 = vadd.f32 %v148, %v299
    %v301 = vpop.f32.mrf.mxu0
    %v302 = vadd.f32 %v144, %v301
    %v303 = vpop.f32.mrf.mxu0
    %v304 = vadd.f32 %v148, %v303
    %305 = vdwg.mxu0
    %v306 = vld [vmem:[#allocation7] sm:$0xf]
    %v307 = vld [vmem:[%s4] sm:$0xf]
    %v308 = vadd.f32 %v235, %v239
    %v309 = vadd.f32 %v308, %v245
    %v310 = vadd.f32 %v309, %v249
    %v311 = vrot.slane %v310, 4
    %v312 = vadd.f32 %v310, %v311
    %v313 = vrot.slane %v312, 2
    %v314 = vadd.f32 %v312, %v313
    %v315 = vrot.slane %v314, 1
    %v316 = vadd.f32 %v314, %v315
    %v317 = vadd.f32 %v237, %v241
    %v318 = vadd.f32 %v317, %v247
    %v319 = vadd.f32 %v318, %v251
    %v320 = vrot.slane %v319, 4
    %v321 = vadd.f32 %v319, %v320
    %v322 = vrot.slane %v321, 2
    %v323 = vadd.f32 %v321, %v322
    %v324 = vrot.slane %v323, 1
    %v325 = vadd.f32 %v323, %v324
    %v326 = vadd.f32 %v288, %v292
    %v327 = vadd.f32 %v326, %v298
    %v328 = vadd.f32 %v327, %v302
    %v329 = vrot.slane %v328, 4
    %v330 = vadd.f32 %v328, %v329
    %v331 = vrot.slane %v330, 2
    %v332 = vadd.f32 %v330, %v331
    %v333 = vrot.slane %v332, 1
    %v334 = vadd.f32 %v332, %v333
    %v335 = vadd.f32 %v290, %v294
    %v336 = vadd.f32 %v335, %v300
    %v337 = vadd.f32 %v336, %v304
    %v338 = vrot.slane %v337, 4
    %v339 = vadd.f32 %v337, %v338
    %v340 = vrot.slane %v339, 2
    %v341 = vadd.f32 %v339, %v340
    %v342 = vrot.slane %v341, 1
    %v343 = vadd.f32 %v341, %v342
    %v344 = vmul.f32 %v235, %v235
    %v345 = vmul.f32 %v237, %v237
    %v346 = vmul.f32 %v288, %v288
    %v347 = vmul.f32 %v290, %v290
    %v348 = vmul.f32 %v239, %v239
    %v349 = vmul.f32 %v241, %v241
    %v350 = vmul.f32 %v292, %v292
    %v351 = vmul.f32 %v294, %v294
    %v352 = vmul.f32 %v245, %v245
    %v353 = vmul.f32 %v247, %v247
    %v354 = vmul.f32 %v298, %v298
    %v355 = vmul.f32 %v300, %v300
    %v356 = vmul.f32 %v249, %v249
    %v357 = vmul.f32 %v251, %v251
    %v358 = vmul.f32 %v302, %v302
    %v359 = vmul.f32 %v304, %v304
    %v360 = vadd.f32 %v344, %v348
    %v361 = vadd.f32 %v360, %v352
    %v362 = vadd.f32 %v361, %v356
    %v363 = vrot.slane %v362, 4
    %v364 = vadd.f32 %v362, %v363
    %v365 = vrot.slane %v364, 2
    %v366 = vadd.f32 %v364, %v365
    %v367 = vrot.slane %v366, 1
    %v368 = vadd.f32 %v366, %v367
    %v369 = vadd.f32 %v345, %v349
    %v370 = vadd.f32 %v369, %v353
    %v371 = vadd.f32 %v370, %v357
    %v372 = vrot.slane %v371, 4
    %v373 = vadd.f32 %v371, %v372
    %v374 = vrot.slane %v373, 2
    %v375 = vadd.f32 %v373, %v374
    %v376 = vrot.slane %v375, 1
    %v377 = vadd.f32 %v375, %v376
    %v378 = vadd.f32 %v346, %v350
    %v379 = vadd.f32 %v378, %v354
    %v380 = vadd.f32 %v379, %v358
    %v381 = vrot.slane %v380, 4
    %v382 = vadd.f32 %v380, %v381
    %v383 = vrot.slane %v382, 2
    %v384 = vadd.f32 %v382, %v383
    %v385 = vrot.slane %v384, 1
    %v386 = vadd.f32 %v384, %v385
    %v387 = vadd.f32 %v347, %v351
    %v388 = vadd.f32 %v387, %v355
    %v389 = vadd.f32 %v388, %v359
    %v390 = vrot.slane %v389, 4
    %v391 = vadd.f32 %v389, %v390
    %v392 = vrot.slane %v391, 2
    %v393 = vadd.f32 %v391, %v392
    %v394 = vrot.slane %v393, 1
    %v395 = vadd.f32 %v393, %v394
    %396 = vrot.lane.b32.xlu0 %v316, 32
    %v397 = vpop.permute.xlu0 %396
    %398 = vrot.lane.b32.xlu0 %v325, 32
    %v399 = vpop.permute.xlu0 %398
    %400 = vrot.lane.b32.xlu0 %v334, 32
    %v401 = vpop.permute.xlu0 %400
    %402 = vrot.lane.b32.xlu0 %v343, 32
    %v403 = vpop.permute.xlu0 %402
    %v404 = vlaneseq
    %v405 = vand.u32 %v404, 127
    %vm406 = vcmp.lt.s32.totalorder %v405, 32
    %v407 = vsel %vm406, %v401, %v403
    %v408 = vsel %vm406, %v399, %v401
    %v409 = vsel %vm406, %v397, %v399
    %v410 = vsel %vm406, %v403, %v397
    %v411 = vadd.f32 %v316, %v410
    %v412 = vadd.f32 %v325, %v409
    %v413 = vadd.f32 %v334, %v408
    %v414 = vadd.f32 %v343, %v407
    %415 = vrot.lane.b32.xlu0 %v411, 64
    %v416 = vpop.permute.xlu0 %415
    %417 = vrot.lane.b32.xlu0 %v412, 64
    %v418 = vpop.permute.xlu0 %417
    %419 = vrot.lane.b32.xlu0 %v413, 64
    %v420 = vpop.permute.xlu0 %419
    %421 = vrot.lane.b32.xlu0 %v414, 64
    %v422 = vpop.permute.xlu0 %421
    %vm423 = vcmp.lt.s32.totalorder %v405, 64
    %v424 = vsel %vm423, %v420, %v422
    %v425 = vsel %vm423, %v418, %v420
    %v426 = vsel %vm423, %v416, %v418
    %v427 = vsel %vm423, %v422, %v416
    %v428 = vadd.f32 %v411, %v427
    %v429 = vadd.f32 %v412, %v426
    %v430 = vadd.f32 %v413, %v425
    %v431 = vadd.f32 %v414, %v424
    %v432 = vadd.f32 %v428, %v431
    %v433 = vadd.f32 %v429, %v428
    %v434 = vadd.f32 %v430, %v429
    %v435 = vadd.f32 %v431, %v430
    %v436 = vadd.f32 %v432, %v434
    %v437 = vadd.f32 %v433, %v435
    %v438 = vmul.f32 %v436, 0.001953125
    %v439 = vmul.f32 %v437, 0.001953125
    %440 = vrot.lane.b32.xlu0 %v368, 32
    %v441 = vpop.permute.xlu0 %440
    %442 = vrot.lane.b32.xlu0 %v377, 32
    %v443 = vpop.permute.xlu0 %442
    %444 = vrot.lane.b32.xlu0 %v386, 32
    %v445 = vpop.permute.xlu0 %444
    %446 = vrot.lane.b32.xlu0 %v395, 32
    %v447 = vpop.permute.xlu0 %446
    %v448 = vsel %vm406, %v445, %v447
    %v449 = vsel %vm406, %v443, %v445
    %v450 = vsel %vm406, %v441, %v443
    %v451 = vsel %vm406, %v447, %v441
    %v452 = vadd.f32 %v368, %v451
    %v453 = vadd.f32 %v377, %v450
    %v454 = vadd.f32 %v386, %v449
    %v455 = vadd.f32 %v395, %v448
    %456 = vrot.lane.b32.xlu0 %v452, 64
    %v457 = vpop.permute.xlu0 %456
    %458 = vrot.lane.b32.xlu0 %v453, 64
    %v459 = vpop.permute.xlu0 %458
    %460 = vrot.lane.b32.xlu0 %v454, 64
    %v461 = vpop.permute.xlu0 %460
    %462 = vrot.lane.b32.xlu0 %v455, 64
    %v463 = vpop.permute.xlu0 %462
    %v464 = vsel %vm423, %v461, %v463
    %v465 = vsel %vm423, %v459, %v461
    %v466 = vsel %vm423, %v457, %v459
    %v467 = vsel %vm423, %v463, %v457
    %v468 = vadd.f32 %v452, %v467
    %v469 = vadd.f32 %v453, %v466
    %v470 = vadd.f32 %v454, %v465
    %v471 = vadd.f32 %v455, %v464
    %v472 = vadd.f32 %v468, %v471
    %v473 = vadd.f32 %v469, %v468
    %v474 = vadd.f32 %v470, %v469
    %v475 = vadd.f32 %v471, %v470
    %v476 = vadd.f32 %v472, %v474
    %v477 = vadd.f32 %v473, %v475
    %v478 = vmul.f32 %v476, 0.001953125
    %v479 = vmul.f32 %v477, 0.001953125
    %v480 = vmul.f32 %v438, %v438
    %v481 = vmul.f32 %v439, %v439
    %v482 = vsub.f32 %v478, %v480
    %v483 = vsub.f32 %v479, %v481
    %v484 = vadd.f32 %v482, 1e-05
    %v485 = vadd.f32 %v483, 1e-05
    %v486 = vrsqrt.pop %v484
    %v487 = vrsqrt.pop %v485
    %v490 = vcombine.low %v486, %v487
    %v492 = vunpack.c.l.s4 1966171168
    %v493 = vunpack.c.0.s8 %v492
    %v494 = vlaneseq
    %v495 = vshrl.u32 %v494, 7
    %v496 = vsub.s32 %v493, %v495
    %v497 = vrot.slane %v490, %v496
    %v498 = vcombine.low %v497, %v497
    %v500 = vunpack.c.l.s4 1966171168
    %v501 = vunpack.c.0.s8 %v500
    %v502 = vlaneseq
    %v503 = vshrl.u32 %v502, 7
    %v504 = vsub.s32 %v501, %v503
    %v505 = vrot.slane %v498, %v504
    %v507 = vmul.f32 %v306, %v505
    %v509 = vlaneseq
    %v510 = vshrl.u32 %v509, 7
    %v511 = vsub.s32 0, %v510
    %v512 = vrot.slane %v507, %v511
    %v513 = vlaneseq
    %v514 = vshrl.u32 %v513, 7
    %v515 = vsub.s32 1, %v514
    %v516 = vrot.slane %v507, %v515
    %v517 = vlaneseq
    %v518 = vshrl.u32 %v517, 7
    %v519 = vsub.s32 2, %v518
    %v520 = vrot.slane %v507, %v519
    %v521 = vlaneseq
    %v522 = vshrl.u32 %v521, 7
    %v523 = vsub.s32 3, %v522
    %v524 = vrot.slane %v507, %v523
    %v529 = vmul.f32 %v438, %v512
    %v530 = vmul.f32 %v439, %v516
    %v531 = vmul.f32 %v438, %v520
    %v532 = vmul.f32 %v439, %v524
    %v537 = vcombine.low %v529, %v530
    %v538 = vcombine.low %v531, %v532
    %v540 = vunpack.c.l.s4 1966171168
    %v541 = vunpack.c.0.s8 %v540
    %v542 = vlaneseq
    %v543 = vshrl.u32 %v542, 7
    %v544 = vsub.s32 %v541, %v543
    %v545 = vrot.slane %v537, %v544
    %v547 = vunpack.c.l.s4 1966171168
    %v548 = vunpack.c.0.s8 %v547
    %v549 = vlaneseq
    %v550 = vshrl.u32 %v549, 7
    %v551 = vsub.s32 %v548, %v550
    %v552 = vrot.slane %v538, %v551
    %v553 = vcombine.low %v545, %v552
    %v555 = vunpack.c.l.s4 1966171168
    %v556 = vunpack.c.0.s8 %v555
    %v557 = vlaneseq
    %v558 = vshrl.u32 %v557, 7
    %v559 = vsub.s32 %v556, %v558
    %v560 = vrot.slane %v553, %v559
    %v562 = vsub.f32 %v307, %v560
    %v563 = vmul.f32 %v235, %v512
    %v564 = vmul.f32 %v237, %v516
    %v565 = vmul.f32 %v288, %v520
    %v566 = vmul.f32 %v290, %v524
    %v567 = vmul.f32 %v239, %v512
    %v568 = vmul.f32 %v241, %v516
    %v569 = vmul.f32 %v292, %v520
    %v570 = vmul.f32 %v294, %v524
    %v571 = vmul.f32 %v245, %v512
    %v572 = vmul.f32 %v247, %v516
    %v573 = vmul.f32 %v298, %v520
    %v574 = vmul.f32 %v300, %v524
    %v575 = vmul.f32 %v249, %v512
    %v576 = vmul.f32 %v251, %v516
    %v577 = vmul.f32 %v302, %v520
    %v578 = vmul.f32 %v304, %v524
    %v580 = vlaneseq
    %v581 = vshrl.u32 %v580, 7
    %v582 = vsub.s32 0, %v581
    %v583 = vrot.slane %v562, %v582
    %v584 = vlaneseq
    %v585 = vshrl.u32 %v584, 7
    %v586 = vsub.s32 1, %v585
    %v587 = vrot.slane %v562, %v586
    %v588 = vlaneseq
    %v589 = vshrl.u32 %v588, 7
    %v590 = vsub.s32 2, %v589
    %v591 = vrot.slane %v562, %v590
    %v592 = vlaneseq
    %v593 = vshrl.u32 %v592, 7
    %v594 = vsub.s32 3, %v593
    %v595 = vrot.slane %v562, %v594
    %v600 = vadd.f32 %v563, %v583
    %v601 = vadd.f32 %v564, %v587
    %v602 = vadd.f32 %v565, %v591
    %v603 = vadd.f32 %v566, %v595
    %v604 = vadd.f32 %v567, %v583
    %v605 = vadd.f32 %v568, %v587
    %v606 = vadd.f32 %v569, %v591
    %v607 = vadd.f32 %v570, %v595
    %v608 = vadd.f32 %v571, %v583
    %v609 = vadd.f32 %v572, %v587
    %v610 = vadd.f32 %v573, %v591
    %v611 = vadd.f32 %v574, %v595
    %v612 = vadd.f32 %v575, %v583
    %v613 = vadd.f32 %v576, %v587
    %v614 = vadd.f32 %v577, %v591
    %v615 = vadd.f32 %v578, %v595
    %v616 = vmul.f32 %v600, 0.01
    %v617 = vmul.f32 %v601, 0.01
    %v618 = vmul.f32 %v602, 0.01
    %v619 = vmul.f32 %v603, 0.01
    %v620 = vmul.f32 %v604, 0.01
    %v621 = vmul.f32 %v605, 0.01
    %v622 = vmul.f32 %v606, 0.01
    %v623 = vmul.f32 %v607, 0.01
    %v624 = vmul.f32 %v608, 0.01
    %v625 = vmul.f32 %v609, 0.01
    %v626 = vmul.f32 %v610, 0.01
    %v627 = vmul.f32 %v611, 0.01
    %v628 = vmul.f32 %v612, 0.01
    %v629 = vmul.f32 %v613, 0.01
    %v630 = vmul.f32 %v614, 0.01
    %v631 = vmul.f32 %v615, 0.01
    %v632 = vmax.f32 %v600, %v616
    %v633 = vmax.f32 %v601, %v617
    %v634 = vmax.f32 %v602, %v618
    %v635 = vmax.f32 %v603, %v619
    %v636 = vmax.f32 %v604, %v620
    %v637 = vmax.f32 %v605, %v621
    %v638 = vmax.f32 %v606, %v622
    %v639 = vmax.f32 %v607, %v623
    %v640 = vmax.f32 %v608, %v624
    %v641 = vmax.f32 %v609, %v625
    %v642 = vmax.f32 %v610, %v626
    %v643 = vmax.f32 %v611, %v627
    %v644 = vmax.f32 %v612, %v628
    %v645 = vmax.f32 %v613, %v629
    %v646 = vmax.f32 %v614, %v630
    %v647 = vmax.f32 %v615, %v631
    %v648 = vpack.c.bf16 %v636, %v632
    %v649 = vpack.c.bf16 %v637, %v633
    %v650 = vpack.c.bf16 %v638, %v634
    %v651 = vpack.c.bf16 %v639, %v635
    %v652 = vpack.c.bf16 %v644, %v640
    %v653 = vpack.c.bf16 %v645, %v641
    %v654 = vpack.c.bf16 %v646, %v642
    %v655 = vpack.c.bf16 %v647, %v643
    %v656 = vld [vmem:[#allocation9] sm:$0xf]
    %v657 = vld [vmem:[#allocation9 + $0x4] sm:$0xf]
    %v658 = vld [vmem:[#allocation9 + $0x8] sm:$0xf]
    %v659 = vld [vmem:[#allocation9 + $0xc] sm:$0xf]
    %v660 = vld [vmem:[#allocation9 + $0x10] sm:$0xf]
    %v661 = vld [vmem:[#allocation9 + $0x14] sm:$0xf]
    %v662 = vld [vmem:[#allocation9 + $0x18] sm:$0xf]
    %v663 = vld [vmem:[#allocation9 + $0x1c] sm:$0xf]
    %v664 = vld [vmem:[#allocation9 + $0x20] sm:$0xf]
    %v665 = vld [vmem:[#allocation9 + $0x24] sm:$0xf]
    %v666 = vld [vmem:[#allocation9 + $0x28] sm:$0xf]
    %v667 = vld [vmem:[#allocation9 + $0x2c] sm:$0xf]
    %v668 = vld [vmem:[#allocation9 + $0x30] sm:$0xf]
    %v669 = vld [vmem:[#allocation9 + $0x34] sm:$0xf]
    %v670 = vld [vmem:[#allocation9 + $0x38] sm:$0xf]
    %v671 = vld [vmem:[#allocation9 + $0x3c] sm:$0xf]
    %v672 = vld [vmem:[#allocation9 + $0x40] sm:$0xf]
    %v673 = vld [vmem:[#allocation9 + $0x44] sm:$0xf]
    %v674 = vld [vmem:[#allocation9 + $0x48] sm:$0xf]
    %v675 = vld [vmem:[#allocation9 + $0x4c] sm:$0xf]
    %v676 = vld [vmem:[#allocation9 + $0x50] sm:$0xf]
    %v677 = vld [vmem:[#allocation9 + $0x54] sm:$0xf]
    %v678 = vld [vmem:[#allocation9 + $0x58] sm:$0xf]
    %v679 = vld [vmem:[#allocation9 + $0x5c] sm:$0xf]
    %v680 = vld [vmem:[#allocation9 + $0x60] sm:$0xf]
    %v681 = vld [vmem:[#allocation9 + $0x64] sm:$0xf]
    %v682 = vld [vmem:[#allocation9 + $0x68] sm:$0xf]
    %v683 = vld [vmem:[#allocation9 + $0x6c] sm:$0xf]
    %v684 = vld [vmem:[#allocation9 + $0x70] sm:$0xf]
    %v685 = vld [vmem:[#allocation9 + $0x74] sm:$0xf]
    %v686 = vld [vmem:[#allocation9 + $0x78] sm:$0xf]
    %v687 = vld [vmem:[#allocation9 + $0x7c] sm:$0xf]
    %v688 = vld [vmem:[#allocation9 + $0x80] sm:$0xf]
    %v689 = vld [vmem:[#allocation9 + $0x84] sm:$0xf]
    %v690 = vld [vmem:[#allocation9 + $0x88] sm:$0xf]
    %v691 = vld [vmem:[#allocation9 + $0x8c] sm:$0xf]
    %v692 = vld [vmem:[#allocation9 + $0x90] sm:$0xf]
    %v693 = vld [vmem:[#allocation9 + $0x94] sm:$0xf]
    %v694 = vld [vmem:[#allocation9 + $0x98] sm:$0xf]
    %v695 = vld [vmem:[#allocation9 + $0x9c] sm:$0xf]
    %v696 = vld [vmem:[#allocation9 + $0xa0] sm:$0xf]
    %v697 = vld [vmem:[#allocation9 + $0xa4] sm:$0xf]
    %v698 = vld [vmem:[#allocation9 + $0xa8] sm:$0xf]
    %v699 = vld [vmem:[#allocation9 + $0xac] sm:$0xf]
    %v700 = vld [vmem:[#allocation9 + $0xb0] sm:$0xf]
    %v701 = vld [vmem:[#allocation9 + $0xb4] sm:$0xf]
    %v702 = vld [vmem:[#allocation9 + $0xb8] sm:$0xf]
    %v703 = vld [vmem:[#allocation9 + $0xbc] sm:$0xf]
    %v704 = vld [vmem:[#allocation9 + $0xc0] sm:$0xf]
    %v705 = vld [vmem:[#allocation9 + $0xc4] sm:$0xf]
    %v706 = vld [vmem:[#allocation9 + $0xc8] sm:$0xf]
    %v707 = vld [vmem:[#allocation9 + $0xcc] sm:$0xf]
    %v708 = vld [vmem:[#allocation9 + $0xd0] sm:$0xf]
    %v709 = vld [vmem:[#allocation9 + $0xd4] sm:$0xf]
    %v710 = vld [vmem:[#allocation9 + $0xd8] sm:$0xf]
    %v711 = vld [vmem:[#allocation9 + $0xdc] sm:$0xf]
    %v712 = vld [vmem:[#allocation9 + $0xe0] sm:$0xf]
    %v713 = vld [vmem:[#allocation9 + $0xe4] sm:$0xf]
    %v714 = vld [vmem:[#allocation9 + $0xe8] sm:$0xf]
    %v715 = vld [vmem:[#allocation9 + $0xec] sm:$0xf]
    %v716 = vld [vmem:[#allocation9 + $0xf0] sm:$0xf]
    %v717 = vld [vmem:[#allocation9 + $0xf4] sm:$0xf]
    %v718 = vld [vmem:[#allocation9 + $0xf8] sm:$0xf]
    %v719 = vld [vmem:[#allocation9 + $0xfc] sm:$0xf]
    %v720 = vld [vmem:[%s6] sm:$0x1]
    %v722 = vlaneseq
    %v723 = vshrl.u32 %v722, 7
    %v724 = vsub.s32 0, %v723
    %v725 = vrot.slane %v720, %v724
    %v791 = vunpack.c.l.b16 %v656
    %v792 = vunpack.c.l.b16 %v657
    %v793 = vunpack.c.l.b16 %v658
    %v794 = vunpack.c.l.b16 %v659
    %v795 = vunpack.c.l.b16 %v660
    %v796 = vunpack.c.l.b16 %v661
    %v797 = vunpack.c.l.b16 %v662
    %v798 = vunpack.c.l.b16 %v663
    %v799 = vunpack.c.l.b16 %v664
    %v800 = vunpack.c.l.b16 %v665
    %v801 = vunpack.c.l.b16 %v666
    %v802 = vunpack.c.l.b16 %v667
    %v803 = vunpack.c.l.b16 %v668
    %v804 = vunpack.c.l.b16 %v669
    %v805 = vunpack.c.l.b16 %v670
    %v806 = vunpack.c.l.b16 %v671
    %v807 = vunpack.c.l.b16 %v672
    %v808 = vunpack.c.l.b16 %v673
    %v809 = vunpack.c.l.b16 %v674
    %v810 = vunpack.c.l.b16 %v675
    %v811 = vunpack.c.l.b16 %v676
    %v812 = vunpack.c.l.b16 %v677
    %v813 = vunpack.c.l.b16 %v678
    %v814 = vunpack.c.l.b16 %v679
    %v815 = vunpack.c.l.b16 %v680
    %v816 = vunpack.c.l.b16 %v681
    %v817 = vunpack.c.l.b16 %v682
    %v818 = vunpack.c.l.b16 %v683
    %v819 = vunpack.c.l.b16 %v684
    %v820 = vunpack.c.l.b16 %v685
    %v821 = vunpack.c.l.b16 %v686
    %v822 = vunpack.c.l.b16 %v687
    %v823 = vunpack.c.l.b16 %v688
    %v824 = vunpack.c.l.b16 %v689
    %v825 = vunpack.c.l.b16 %v690
    %v826 = vunpack.c.l.b16 %v691
    %v827 = vunpack.c.l.b16 %v692
    %v828 = vunpack.c.l.b16 %v693
    %v829 = vunpack.c.l.b16 %v694
    %v830 = vunpack.c.l.b16 %v695
    %v831 = vunpack.c.l.b16 %v696
    %v832 = vunpack.c.l.b16 %v697
    %v833 = vunpack.c.l.b16 %v698
    %v834 = vunpack.c.l.b16 %v699
    %v835 = vunpack.c.l.b16 %v700
    %v836 = vunpack.c.l.b16 %v701
    %v837 = vunpack.c.l.b16 %v702
    %v838 = vunpack.c.l.b16 %v703
    %v839 = vunpack.c.l.b16 %v704
    %v840 = vunpack.c.l.b16 %v705
    %v841 = vunpack.c.l.b16 %v706
    %v842 = vunpack.c.l.b16 %v707
    %v843 = vunpack.c.l.b16 %v708
    %v844 = vunpack.c.l.b16 %v709
    %v845 = vunpack.c.l.b16 %v710
    %v846 = vunpack.c.l.b16 %v711
    %v847 = vunpack.c.l.b16 %v712
    %v848 = vunpack.c.l.b16 %v713
    %v849 = vunpack.c.l.b16 %v714
    %v850 = vunpack.c.l.b16 %v715
    %v851 = vunpack.c.l.b16 %v716
    %v852 = vunpack.c.l.b16 %v717
    %v853 = vunpack.c.l.b16 %v718
    %v854 = vunpack.c.l.b16 %v719
    %v855 = vpack.c.b16 %v792, %v791
    %v856 = vpack.c.b16 %v794, %v793
    %v857 = vpack.c.b16 %v796, %v795
    %v858 = vpack.c.b16 %v798, %v797
    %v859 = vpack.c.b16 %v800, %v799
    %v860 = vpack.c.b16 %v802, %v801
    %v861 = vpack.c.b16 %v804, %v803
    %v862 = vpack.c.b16 %v806, %v805
    %v863 = vpack.c.b16 %v808, %v807
    %v864 = vpack.c.b16 %v810, %v809
    %v865 = vpack.c.b16 %v812, %v811
    %v866 = vpack.c.b16 %v814, %v813
    %v867 = vpack.c.b16 %v816, %v815
    %v868 = vpack.c.b16 %v818, %v817
    %v869 = vpack.c.b16 %v820, %v819
    %v870 = vpack.c.b16 %v822, %v821
    %v871 = vpack.c.b16 %v824, %v823
    %v872 = vpack.c.b16 %v826, %v825
    %v873 = vpack.c.b16 %v828, %v827
    %v874 = vpack.c.b16 %v830, %v829
    %v875 = vpack.c.b16 %v832, %v831
    %v876 = vpack.c.b16 %v834, %v833
    %v877 = vpack.c.b16 %v836, %v835
    %v878 = vpack.c.b16 %v838, %v837
    %v879 = vpack.c.b16 %v840, %v839
    %v880 = vpack.c.b16 %v842, %v841
    %v881 = vpack.c.b16 %v844, %v843
    %v882 = vpack.c.b16 %v846, %v845
    %v883 = vpack.c.b16 %v848, %v847
    %v884 = vpack.c.b16 %v850, %v849
    %v885 = vpack.c.b16 %v852, %v851
    %v886 = vpack.c.b16 %v854, %v853
    %919 = vmatprep.subr.bf16.mxu0 0
    %920 = vmatpush1.bf16.msra.mxu0 %v862
    %921 = vmatprep.subr.bf16.mxu0 0
    %922 = vmatpush1.bf16.msra.mxu0 %v861
    %923 = vmatprep.subr.bf16.mxu0 0
    %924 = vmatpush1.bf16.msra.mxu0 %v860
    %925 = vmatprep.subr.bf16.mxu0 0
    %926 = vmatpush1.bf16.msra.mxu0 %v859
    %927 = vmatprep.subr.bf16.mxu0 0
    %928 = vmatpush1.bf16.msra.mxu0 %v858
    %929 = vmatprep.subr.bf16.mxu0 0
    %930 = vmatpush1.bf16.msra.mxu0 %v857
    %931 = vmatprep.subr.bf16.mxu0 0
    %932 = vmatpush1.bf16.msra.mxu0 %v856
    %933 = vmatprep.subr.bf16.mxu0 0
    %934 = vmatpush1.bf16.msra.mxu0 %v855
    %935 = vmatprep.subr.bf16.mxu0 0
    %936 = vmatpush2.bf16.msra.mxu0 %v870
    %937 = vmatprep.subr.bf16.mxu0 0
    %938 = vmatpush2.bf16.msra.mxu0 %v869
    %939 = vmatprep.subr.bf16.mxu0 0
    %940 = vmatpush2.bf16.msra.mxu0 %v868
    %941 = vmatprep.subr.bf16.mxu0 0
    %942 = vmatpush2.bf16.msra.mxu0 %v867
    %943 = vmatprep.subr.bf16.mxu0 0
    %944 = vmatpush2.bf16.msra.mxu0 %v866
    %945 = vmatprep.subr.bf16.mxu0 0
    %946 = vmatpush2.bf16.msra.mxu0 %v865
    %947 = vmatprep.subr.bf16.mxu0 0
    %948 = vmatpush2.bf16.msra.mxu0 %v864
    %949 = vmatprep.subr.bf16.mxu0 0
    %950 = vmatpush2.bf16.msra.mxu0 %v863
    %951 = vmatprep.mubr.bf16.mxu0 %v649
    %952 = vmatmul.mubr.bf16.gmra.mxu0 %v648
    %v953 = vpop.f32.mrf.mxu0
    %v954 = vadd.f32 %v725, %v953
    %v955 = vpop.f32.mrf.mxu0
    %v956 = vpop.f32.mrf.mxu0
    %v957 = vadd.f32 %v725, %v956
    %v958 = vpop.f32.mrf.mxu0
    %959 = vmatprep.mubr.bf16.mxu0 %v653
    %960 = vmatmul.mubr.bf16.gmra.mxu0 %v652
    %v961 = vpop.f32.mrf.mxu0
    %v962 = vadd.f32 %v725, %v961
    %v963 = vpop.f32.mrf.mxu0
    %v964 = vpop.f32.mrf.mxu0
    %v965 = vadd.f32 %v725, %v964
    %v966 = vpop.f32.mrf.mxu0
    %967 = vmatprep.mubr.bf16.mxu0 0
    %968 = vmatmul.mubr.bf16.gmra.mxu0 %v649
    %v969 = vpop.f32.mrf.mxu0
    %v970 = vadd.f32 %v725, %v969
    %v971 = vpop.f32.mrf.mxu0
    %v972 = vpop.f32.mrf.mxu0
    %v973 = vadd.f32 %v725, %v972
    %v974 = vpop.f32.mrf.mxu0
    %975 = vmatprep.mubr.bf16.mxu0 0
    %976 = vmatmul.mubr.bf16.gmra.mxu0 %v653
    %v977 = vpop.f32.mrf.mxu0
    %v978 = vadd.f32 %v725, %v977
    %v979 = vpop.f32.mrf.mxu0
    %v980 = vpop.f32.mrf.mxu0
    %v981 = vadd.f32 %v725, %v980
    %v982 = vpop.f32.mrf.mxu0
    %983 = vmatprep.mubr.bf16.mxu0 %v651
    %984 = vmatmul.mubr.bf16.gmra.mxu0 %v650
    %v985 = vpop.f32.mrf.mxu0
    %v986 = vadd.f32 %v725, %v985
    %v987 = vpop.f32.mrf.mxu0
    %v988 = vpop.f32.mrf.mxu0
    %v989 = vadd.f32 %v725, %v988
    %v990 = vpop.f32.mrf.mxu0
    %991 = vmatprep.mubr.bf16.mxu0 %v655
    %992 = vmatmul.mubr.bf16.gmra.mxu0 %v654
    %v993 = vpop.f32.mrf.mxu0
    %v994 = vadd.f32 %v725, %v993
    %v995 = vpop.f32.mrf.mxu0
    %v996 = vpop.f32.mrf.mxu0
    %v997 = vadd.f32 %v725, %v996
    %v998 = vpop.f32.mrf.mxu0
    %999 = vmatprep.mubr.bf16.mxu0 0
    %1000 = vmatmul.mubr.bf16.gmra.mxu0 %v651
    %v1001 = vpop.f32.mrf.mxu0
    %v1002 = vadd.f32 %v725, %v1001
    %v1003 = vpop.f32.mrf.mxu0
    %v1004 = vpop.f32.mrf.mxu0
    %v1005 = vadd.f32 %v725, %v1004
    %v1006 = vpop.f32.mrf.mxu0
    %1007 = vmatprep.mubr.bf16.mxu0 0
    %1008 = vmatmul.mubr.bf16.gmra.mxu0 %v655
    %v1009 = vpop.f32.mrf.mxu0
    %v1010 = vadd.f32 %v725, %v1009
    %v1011 = vpop.f32.mrf.mxu0
    %v1012 = vpop.f32.mrf.mxu0
    %v1013 = vadd.f32 %v725, %v1012
    %v1014 = vpop.f32.mrf.mxu0
    %1015 = vdwg.mxu0
    %1016 = vmatprep.subr.bf16.mxu0 0
    %1017 = vmatpush1.bf16.msra.mxu0 %v878
    %1018 = vmatprep.subr.bf16.mxu0 0
    %1019 = vmatpush1.bf16.msra.mxu0 %v877
    %1020 = vmatprep.subr.bf16.mxu0 0
    %1021 = vmatpush1.bf16.msra.mxu0 %v876
    %1022 = vmatprep.subr.bf16.mxu0 0
    %1023 = vmatpush1.bf16.msra.mxu0 %v875
    %1024 = vmatprep.subr.bf16.mxu0 0
    %1025 = vmatpush1.bf16.msra.mxu0 %v874
    %1026 = vmatprep.subr.bf16.mxu0 0
    %1027 = vmatpush1.bf16.msra.mxu0 %v873
    %1028 = vmatprep.subr.bf16.mxu0 0
    %1029 = vmatpush1.bf16.msra.mxu0 %v872
    %1030 = vmatprep.subr.bf16.mxu0 0
    %1031 = vmatpush1.bf16.msra.mxu0 %v871
    %1032 = vmatprep.subr.bf16.mxu0 0
    %1033 = vmatpush2.bf16.msra.mxu0 %v886
    %1034 = vmatprep.subr.bf16.mxu0 0
    %1035 = vmatpush2.bf16.msra.mxu0 %v885
    %1036 = vmatprep.subr.bf16.mxu0 0
    %1037 = vmatpush2.bf16.msra.mxu0 %v884
    %1038 = vmatprep.subr.bf16.mxu0 0
    %1039 = vmatpush2.bf16.msra.mxu0 %v883
    %1040 = vmatprep.subr.bf16.mxu0 0
    %1041 = vmatpush2.bf16.msra.mxu0 %v882
    %1042 = vmatprep.subr.bf16.mxu0 0
    %1043 = vmatpush2.bf16.msra.mxu0 %v881
    %1044 = vmatprep.subr.bf16.mxu0 0
    %1045 = vmatpush2.bf16.msra.mxu0 %v880
    %1046 = vmatprep.subr.bf16.mxu0 0
    %1047 = vmatpush2.bf16.msra.mxu0 %v879
    %1048 = vmatprep.mubr.bf16.mxu0 %v651
    %1049 = vmatmul.mubr.bf16.gmra.mxu0 %v650
    %v1050 = vpop.f32.mrf.mxu0
    %v1051 = vadd.f32 %v954, %v1050
    %v1052 = vpop.f32.mrf.mxu0
    %v1053 = vpop.f32.mrf.mxu0
    %v1054 = vadd.f32 %v957, %v1053
    %v1055 = vpop.f32.mrf.mxu0
    %1056 = vmatprep.mubr.bf16.mxu0 %v655
    %1057 = vmatmul.mubr.bf16.gmra.mxu0 %v654
    %v1058 = vpop.f32.mrf.mxu0
    %v1059 = vadd.f32 %v962, %v1058
    %v1060 = vpop.f32.mrf.mxu0
    %v1061 = vpop.f32.mrf.mxu0
    %v1062 = vadd.f32 %v965, %v1061
    %v1063 = vpop.f32.mrf.mxu0
    %1064 = vmatprep.mubr.bf16.mxu0 0
    %1065 = vmatmul.mubr.bf16.gmra.mxu0 %v651
    %v1066 = vpop.f32.mrf.mxu0
    %v1067 = vadd.f32 %v970, %v1066
    %v1068 = vpop.f32.mrf.mxu0
    %v1069 = vpop.f32.mrf.mxu0
    %v1070 = vadd.f32 %v973, %v1069
    %v1071 = vpop.f32.mrf.mxu0
    %1072 = vmatprep.mubr.bf16.mxu0 0
    %1073 = vmatmul.mubr.bf16.gmra.mxu0 %v655
    %v1074 = vpop.f32.mrf.mxu0
    %v1075 = vadd.f32 %v978, %v1074
    %v1076 = vpop.f32.mrf.mxu0
    %v1077 = vpop.f32.mrf.mxu0
    %v1078 = vadd.f32 %v981, %v1077
    %v1079 = vpop.f32.mrf.mxu0
    %1080 = vmatprep.mubr.bf16.mxu0 0
    %1081 = vmatmul.mubr.bf16.gmra.mxu0 0
    %v1082 = vpop.f32.mrf.mxu0
    %v1083 = vadd.f32 %v986, %v1082
    %v1084 = vpop.f32.mrf.mxu0
    %v1085 = vpop.f32.mrf.mxu0
    %v1086 = vadd.f32 %v989, %v1085
    %v1087 = vpop.f32.mrf.mxu0
    %1088 = vmatprep.mubr.bf16.mxu0 0
    %1089 = vmatmul.mubr.bf16.gmra.mxu0 0
    %v1090 = vpop.f32.mrf.mxu0
    %v1091 = vadd.f32 %v994, %v1090
    %v1092 = vpop.f32.mrf.mxu0
    %v1093 = vpop.f32.mrf.mxu0
    %v1094 = vadd.f32 %v997, %v1093
    %v1095 = vpop.f32.mrf.mxu0
    %1096 = vmatprep.mubr.bf16.mxu0 0
    %1097 = vmatmul.mubr.bf16.gmra.mxu0 0
    %v1098 = vpop.f32.mrf.mxu0
    %v1099 = vadd.f32 %v1002, %v1098
    %v1100 = vpop.f32.mrf.mxu0
    %v1101 = vpop.f32.mrf.mxu0
    %v1102 = vadd.f32 %v1005, %v1101
    %v1103 = vpop.f32.mrf.mxu0
    %1104 = vmatprep.mubr.bf16.mxu0 0
    %1105 = vmatmul.mubr.bf16.gmra.mxu0 0
    %v1106 = vpop.f32.mrf.mxu0
    %v1107 = vadd.f32 %v1010, %v1106
    %v1108 = vpop.f32.mrf.mxu0
    %v1109 = vpop.f32.mrf.mxu0
    %v1110 = vadd.f32 %v1013, %v1109
    %v1111 = vpop.f32.mrf.mxu0
    %1112 = vdwg.mxu0
    %v1113 = vld [vmem:[%s7] sm:$0x1]
    %v1114 = vld [vmem:[%s8] sm:$0x1]
    %v1115 = vadd.f32 %v1051, %v1054
    %v1116 = vadd.f32 %v1115, %v1059
    %v1117 = vadd.f32 %v1116, %v1062
    %v1118 = vadd.f32 %v1117, %v1067
    %v1119 = vadd.f32 %v1118, %v1070
    %v1120 = vadd.f32 %v1119, %v1075
    %v1121 = vadd.f32 %v1120, %v1078
    %v1122 = vadd.f32 %v1121, %v1083
    %v1123 = vadd.f32 %v1122, %v1086
    %v1124 = vadd.f32 %v1123, %v1091
    %v1125 = vadd.f32 %v1124, %v1094
    %v1126 = vadd.f32 %v1125, %v1099
    %v1127 = vadd.f32 %v1126, %v1102
    %v1128 = vadd.f32 %v1127, %v1107
    %v1129 = vadd.f32 %v1128, %v1110
    %v1130 = vrot.slane %v1129, 4
    %v1131 = vadd.f32 %v1129, %v1130
    %v1132 = vrot.slane %v1131, 2
    %v1133 = vadd.f32 %v1131, %v1132
    %v1134 = vrot.slane %v1133, 1
    %v1135 = vadd.f32 %v1133, %v1134
    %v1136 = vmul.f32 %v1051, %v1051
    %v1137 = vmul.f32 %v1054, %v1054
    %v1138 = vmul.f32 %v1059, %v1059
    %v1139 = vmul.f32 %v1062, %v1062
    %v1140 = vmul.f32 %v1067, %v1067
    %v1141 = vmul.f32 %v1070, %v1070
    %v1142 = vmul.f32 %v1075, %v1075
    %v1143 = vmul.f32 %v1078, %v1078
    %v1144 = vmul.f32 %v1083, %v1083
    %v1145 = vmul.f32 %v1086, %v1086
    %v1146 = vmul.f32 %v1091, %v1091
    %v1147 = vmul.f32 %v1094, %v1094
    %v1148 = vmul.f32 %v1099, %v1099
    %v1149 = vmul.f32 %v1102, %v1102
    %v1150 = vmul.f32 %v1107, %v1107
    %v1151 = vmul.f32 %v1110, %v1110
    %v1152 = vadd.f32 %v1136, %v1137
    %v1153 = vadd.f32 %v1152, %v1138
    %v1154 = vadd.f32 %v1153, %v1139
    %v1155 = vadd.f32 %v1154, %v1140
    %v1156 = vadd.f32 %v1155, %v1141
    %v1157 = vadd.f32 %v1156, %v1142
    %v1158 = vadd.f32 %v1157, %v1143
    %v1159 = vadd.f32 %v1158, %v1144
    %v1160 = vadd.f32 %v1159, %v1145
    %v1161 = vadd.f32 %v1160, %v1146
    %v1162 = vadd.f32 %v1161, %v1147
    %v1163 = vadd.f32 %v1162, %v1148
    %v1164 = vadd.f32 %v1163, %v1149
    %v1165 = vadd.f32 %v1164, %v1150
    %v1166 = vadd.f32 %v1165, %v1151
    %v1167 = vrot.slane %v1166, 4
    %v1168 = vadd.f32 %v1166, %v1167
    %v1169 = vrot.slane %v1168, 2
    %v1170 = vadd.f32 %v1168, %v1169
    %v1171 = vrot.slane %v1170, 1
    %v1172 = vadd.f32 %v1170, %v1171
    %1173 = vrot.lane.b32.xlu0 %v1135, 8
    %v1174 = vpop.permute.xlu0 %1173
    %v1175 = vadd.f32 %v1135, %v1174
    %1176 = vrot.lane.b32.xlu0 %v1175, 16
    %v1177 = vpop.permute.xlu0 %1176
    %v1178 = vadd.f32 %v1175, %v1177
    %1179 = vrot.lane.b32.xlu0 %v1178, 32
    %v1180 = vpop.permute.xlu0 %1179
    %v1181 = vadd.f32 %v1178, %v1180
    %1182 = vrot.lane.b32.xlu0 %v1181, 64
    %v1183 = vpop.permute.xlu0 %1182
    %v1184 = vadd.f32 %v1181, %v1183
    %v1185 = vmul.f32 %v1184, 0.00048828125
    %1186 = vrot.lane.b32.xlu0 %v1172, 8
    %v1187 = vpop.permute.xlu0 %1186
    %v1188 = vadd.f32 %v1172, %v1187
    %1189 = vrot.lane.b32.xlu0 %v1188, 16
    %v1190 = vpop.permute.xlu0 %1189
    %v1191 = vadd.f32 %v1188, %v1190
    %1192 = vrot.lane.b32.xlu0 %v1191, 32
    %v1193 = vpop.permute.xlu0 %1192
    %v1194 = vadd.f32 %v1191, %v1193
    %1195 = vrot.lane.b32.xlu0 %v1194, 64
    %v1196 = vpop.permute.xlu0 %1195
    %v1197 = vadd.f32 %v1194, %v1196
    %v1198 = vmul.f32 %v1197, 0.00048828125
    %v1199 = vmul.f32 %v1185, %v1185
    %v1200 = vsub.f32 %v1198, %v1199
    %v1201 = vadd.f32 %v1200, 1e-05
    %v1202 = vrsqrt.pop %v1201
    %v1203 = vmul.f32 %v1113, %v1202
    %v1204 = vmul.f32 %v1185, %v1203
    %v1205 = vsub.f32 %v1114, %v1204
    %v1207 = vlaneseq
    %v1208 = vshrl.u32 %v1207, 7
    %v1209 = vsub.s32 0, %v1208
    %v1210 = vrot.slane %v1203, %v1209
    %v1212 = vmul.f32 %v1051, %v1210
    %v1213 = vmul.f32 %v1054, %v1210
    %v1214 = vmul.f32 %v1059, %v1210
    %v1215 = vmul.f32 %v1062, %v1210
    %v1216 = vmul.f32 %v1067, %v1210
    %v1217 = vmul.f32 %v1070, %v1210
    %v1218 = vmul.f32 %v1075, %v1210
    %v1219 = vmul.f32 %v1078, %v1210
    %v1220 = vmul.f32 %v1083, %v1210
    %v1221 = vmul.f32 %v1086, %v1210
    %v1222 = vmul.f32 %v1091, %v1210
    %v1223 = vmul.f32 %v1094, %v1210
    %v1224 = vmul.f32 %v1099, %v1210
    %v1225 = vmul.f32 %v1102, %v1210
    %v1226 = vmul.f32 %v1107, %v1210
    %v1227 = vmul.f32 %v1110, %v1210
    %v1229 = vlaneseq
    %v1230 = vshrl.u32 %v1229, 7
    %v1231 = vsub.s32 0, %v1230
    %v1232 = vrot.slane %v1205, %v1231
    %v1234 = vadd.f32 %v1212, %v1232
    %v1235 = vadd.f32 %v1213, %v1232
    %v1236 = vadd.f32 %v1214, %v1232
    %v1237 = vadd.f32 %v1215, %v1232
    %v1238 = vadd.f32 %v1216, %v1232
    %v1239 = vadd.f32 %v1217, %v1232
    %v1240 = vadd.f32 %v1218, %v1232
    %v1241 = vadd.f32 %v1219, %v1232
    %v1242 = vadd.f32 %v1220, %v1232
    %v1243 = vadd.f32 %v1221, %v1232
    %v1244 = vadd.f32 %v1222, %v1232
    %v1245 = vadd.f32 %v1223, %v1232
    %v1246 = vadd.f32 %v1224, %v1232
    %v1247 = vadd.f32 %v1225, %v1232
    %v1248 = vadd.f32 %v1226, %v1232
    %v1249 = vadd.f32 %v1227, %v1232
    %v1250 = vmul.f32 %v1234, 0.01
    %v1251 = vmul.f32 %v1235, 0.01
    %v1252 = vmul.f32 %v1236, 0.01
    %v1253 = vmul.f32 %v1237, 0.01
    %v1254 = vmul.f32 %v1238, 0.01
    %v1255 = vmul.f32 %v1239, 0.01
    %v1256 = vmul.f32 %v1240, 0.01
    %v1257 = vmul.f32 %v1241, 0.01
    %v1258 = vmul.f32 %v1242, 0.01
    %v1259 = vmul.f32 %v1243, 0.01
    %v1260 = vmul.f32 %v1244, 0.01
    %v1261 = vmul.f32 %v1245, 0.01
    %v1262 = vmul.f32 %v1246, 0.01
    %v1263 = vmul.f32 %v1247, 0.01
    %v1264 = vmul.f32 %v1248, 0.01
    %v1265 = vmul.f32 %v1249, 0.01
    %v1266 = vmax.f32 %v1234, %v1250
    %v1267 = vmax.f32 %v1235, %v1251
    %v1268 = vmax.f32 %v1236, %v1252
    %v1269 = vmax.f32 %v1237, %v1253
    %v1270 = vmax.f32 %v1238, %v1254
    %v1271 = vmax.f32 %v1239, %v1255
    %v1272 = vmax.f32 %v1240, %v1256
    %v1273 = vmax.f32 %v1241, %v1257
    %v1274 = vmax.f32 %v1242, %v1258
    %v1275 = vmax.f32 %v1243, %v1259
    %v1276 = vmax.f32 %v1244, %v1260
    %v1277 = vmax.f32 %v1245, %v1261
    %v1278 = vmax.f32 %v1246, %v1262
    %v1279 = vmax.f32 %v1247, %v1263
    %v1280 = vmax.f32 %v1248, %v1264
    %v1281 = vmax.f32 %v1249, %v1265
    %v1282 = vpack.c.bf16 %v1267, %v1266
    %v1283 = vpack.c.bf16 %v1269, %v1268
    %v1284 = vpack.c.bf16 %v1271, %v1270
    %v1285 = vpack.c.bf16 %v1273, %v1272
    %v1286 = vpack.c.bf16 %v1275, %v1274
    %v1287 = vpack.c.bf16 %v1277, %v1276
    %v1288 = vpack.c.bf16 %v1279, %v1278
    %v1289 = vpack.c.bf16 %v1281, %v1280
    %v1290 = vld [vmem:[#allocation10] sm:$0xff]
    %v1291 = vld [vmem:[#allocation10 + $0x8] sm:$0xff]
    %v1292 = vld [vmem:[#allocation10 + $0x10] sm:$0xff]
    %v1293 = vld [vmem:[#allocation10 + $0x18] sm:$0xff]
    %v1294 = vld [vmem:[#allocation10 + $0x20] sm:$0xff]
    %v1295 = vld [vmem:[#allocation10 + $0x28] sm:$0xff]
    %v1296 = vld [vmem:[#allocation10 + $0x30] sm:$0xff]
    %v1297 = vld [vmem:[#allocation10 + $0x38] sm:$0xff]
    %v1298 = vld [vmem:[#allocation10 + $0x40] sm:$0xff]
    %v1299 = vld [vmem:[#allocation10 + $0x48] sm:$0xff]
    %v1300 = vld [vmem:[#allocation10 + $0x50] sm:$0xff]
    %v1301 = vld [vmem:[#allocation10 + $0x58] sm:$0xff]
    %v1302 = vld [vmem:[#allocation10 + $0x60] sm:$0xff]
    %v1303 = vld [vmem:[#allocation10 + $0x68] sm:$0xff]
    %v1304 = vld [vmem:[#allocation10 + $0x70] sm:$0xff]
    %v1305 = vld [vmem:[#allocation10 + $0x78] sm:$0xff]
    %v1306 = vld [vmem:[#allocation10 + $0x80] sm:$0xff]
    %v1307 = vld [vmem:[#allocation10 + $0x88] sm:$0xff]
    %v1308 = vld [vmem:[#allocation10 + $0x90] sm:$0xff]
    %v1309 = vld [vmem:[#allocation10 + $0x98] sm:$0xff]
    %v1310 = vld [vmem:[#allocation10 + $0xa0] sm:$0xff]
    %v1311 = vld [vmem:[#allocation10 + $0xa8] sm:$0xff]
    %v1312 = vld [vmem:[#allocation10 + $0xb0] sm:$0xff]
    %v1313 = vld [vmem:[#allocation10 + $0xb8] sm:$0xff]
    %v1314 = vld [vmem:[#allocation10 + $0xc0] sm:$0xff]
    %v1315 = vld [vmem:[#allocation10 + $0xc8] sm:$0xff]
    %v1316 = vld [vmem:[#allocation10 + $0xd0] sm:$0xff]
    %v1317 = vld [vmem:[#allocation10 + $0xd8] sm:$0xff]
    %v1318 = vld [vmem:[#allocation10 + $0xe0] sm:$0xff]
    %v1319 = vld [vmem:[#allocation10 + $0xe8] sm:$0xff]
    %v1320 = vld [vmem:[#allocation10 + $0xf0] sm:$0xff]
    %v1321 = vld [vmem:[#allocation10 + $0xf8] sm:$0xff]
    %v1322 = vld [vmem:[#allocation10 + $0x100] sm:$0xff]
    %v1323 = vld [vmem:[#allocation10 + $0x108] sm:$0xff]
    %v1324 = vld [vmem:[#allocation10 + $0x110] sm:$0xff]
    %v1325 = vld [vmem:[#allocation10 + $0x118] sm:$0xff]
    %v1326 = vld [vmem:[#allocation10 + $0x120] sm:$0xff]
    %v1327 = vld [vmem:[#allocation10 + $0x128] sm:$0xff]
    %v1328 = vld [vmem:[#allocation10 + $0x130] sm:$0xff]
    %v1329 = vld [vmem:[#allocation10 + $0x138] sm:$0xff]
    %v1330 = vld [vmem:[#allocation10 + $0x140] sm:$0xff]
    %v1331 = vld [vmem:[#allocation10 + $0x148] sm:$0xff]
    %v1332 = vld [vmem:[#allocation10 + $0x150] sm:$0xff]
    %v1333 = vld [vmem:[#allocation10 + $0x158] sm:$0xff]
    %v1334 = vld [vmem:[#allocation10 + $0x160] sm:$0xff]
    %v1335 = vld [vmem:[#allocation10 + $0x168] sm:$0xff]
    %v1336 = vld [vmem:[#allocation10 + $0x170] sm:$0xff]
    %v1337 = vld [vmem:[#allocation10 + $0x178] sm:$0xff]
    %v1338 = vld [vmem:[#allocation10 + $0x180] sm:$0xff]
    %v1339 = vld [vmem:[#allocation10 + $0x188] sm:$0xff]
    %v1340 = vld [vmem:[#allocation10 + $0x190] sm:$0xff]
    %v1341 = vld [vmem:[#allocation10 + $0x198] sm:$0xff]
    %v1342 = vld [vmem:[#allocation10 + $0x1a0] sm:$0xff]
    %v1343 = vld [vmem:[#allocation10 + $0x1a8] sm:$0xff]
    %v1344 = vld [vmem:[#allocation10 + $0x1b0] sm:$0xff]
    %v1345 = vld [vmem:[#allocation10 + $0x1b8] sm:$0xff]
    %v1346 = vld [vmem:[#allocation10 + $0x1c0] sm:$0xff]
    %v1347 = vld [vmem:[#allocation10 + $0x1c8] sm:$0xff]
    %v1348 = vld [vmem:[#allocation10 + $0x1d0] sm:$0xff]
    %v1349 = vld [vmem:[#allocation10 + $0x1d8] sm:$0xff]
    %v1350 = vld [vmem:[#allocation10 + $0x1e0] sm:$0xff]
    %v1351 = vld [vmem:[#allocation10 + $0x1e8] sm:$0xff]
    %v1352 = vld [vmem:[#allocation10 + $0x1f0] sm:$0xff]
    %v1353 = vld [vmem:[#allocation10 + $0x1f8] sm:$0xff]
    %v1354 = vld [vmem:[%s10] sm:$0x3]
    %v1356 = vlaneseq
    %v1357 = vshrl.u32 %v1356, 7
    %v1358 = vsub.s32 0, %v1357
    %v1359 = vrot.slane %v1354, %v1358
    %v1360 = vlaneseq
    %v1361 = vshrl.u32 %v1360, 7
    %v1362 = vsub.s32 1, %v1361
    %v1363 = vrot.slane %v1354, %v1362
    %v1430 = vunpack.c.l.b16 %v1290
    %v1431 = vunpack.c.h.b16 %v1290
    %v1432 = vunpack.c.l.b16 %v1291
    %v1433 = vunpack.c.h.b16 %v1291
    %v1434 = vunpack.c.l.b16 %v1292
    %v1435 = vunpack.c.h.b16 %v1292
    %v1436 = vunpack.c.l.b16 %v1293
    %v1437 = vunpack.c.h.b16 %v1293
    %v1438 = vunpack.c.l.b16 %v1294
    %v1439 = vunpack.c.h.b16 %v1294
    %v1440 = vunpack.c.l.b16 %v1295
    %v1441 = vunpack.c.h.b16 %v1295
    %v1442 = vunpack.c.l.b16 %v1296
    %v1443 = vunpack.c.h.b16 %v1296
    %v1444 = vunpack.c.l.b16 %v1297
    %v1445 = vunpack.c.h.b16 %v1297
    %v1446 = vunpack.c.l.b16 %v1298
    %v1447 = vunpack.c.h.b16 %v1298
    %v1448 = vunpack.c.l.b16 %v1299
    %v1449 = vunpack.c.h.b16 %v1299
    %v1450 = vunpack.c.l.b16 %v1300
    %v1451 = vunpack.c.h.b16 %v1300
    %v1452 = vunpack.c.l.b16 %v1301
    %v1453 = vunpack.c.h.b16 %v1301
    %v1454 = vunpack.c.l.b16 %v1302
    %v1455 = vunpack.c.h.b16 %v1302
    %v1456 = vunpack.c.l.b16 %v1303
    %v1457 = vunpack.c.h.b16 %v1303
    %v1458 = vunpack.c.l.b16 %v1304
    %v1459 = vunpack.c.h.b16 %v1304
    %v1460 = vunpack.c.l.b16 %v1305
    %v1461 = vunpack.c.h.b16 %v1305
    %v1462 = vunpack.c.l.b16 %v1306
    %v1463 = vunpack.c.h.b16 %v1306
    %v1464 = vunpack.c.l.b16 %v1307
    %v1465 = vunpack.c.h.b16 %v1307
    %v1466 = vunpack.c.l.b16 %v1308
    %v1467 = vunpack.c.h.b16 %v1308
    %v1468 = vunpack.c.l.b16 %v1309
    %v1469 = vunpack.c.h.b16 %v1309
    %v1470 = vunpack.c.l.b16 %v1310
    %v1471 = vunpack.c.h.b16 %v1310
    %v1472 = vunpack.c.l.b16 %v1311
    %v1473 = vunpack.c.h.b16 %v1311
    %v1474 = vunpack.c.l.b16 %v1312
    %v1475 = vunpack.c.h.b16 %v1312
    %v1476 = vunpack.c.l.b16 %v1313
    %v1477 = vunpack.c.h.b16 %v1313
    %v1478 = vunpack.c.l.b16 %v1314
    %v1479 = vunpack.c.h.b16 %v1314
    %v1480 = vunpack.c.l.b16 %v1315
    %v1481 = vunpack.c.h.b16 %v1315
    %v1482 = vunpack.c.l.b16 %v1316
    %v1483 = vunpack.c.h.b16 %v1316
    %v1484 = vunpack.c.l.b16 %v1317
    %v1485 = vunpack.c.h.b16 %v1317
    %v1486 = vunpack.c.l.b16 %v1318
    %v1487 = vunpack.c.h.b16 %v1318
    %v1488 = vunpack.c.l.b16 %v1319
    %v1489 = vunpack.c.h.b16 %v1319
    %v1490 = vunpack.c.l.b16 %v1320
    %v1491 = vunpack.c.h.b16 %v1320
    %v1492 = vunpack.c.l.b16 %v1321
    %v1493 = vunpack.c.h.b16 %v1321
    %v1494 = vunpack.c.l.b16 %v1322
    %v1495 = vunpack.c.h.b16 %v1322
    %v1496 = vunpack.c.l.b16 %v1323
    %v1497 = vunpack.c.h.b16 %v1323
    %v1498 = vunpack.c.l.b16 %v1324
    %v1499 = vunpack.c.h.b16 %v1324
    %v1500 = vunpack.c.l.b16 %v1325
    %v1501 = vunpack.c.h.b16 %v1325
    %v1502 = vunpack.c.l.b16 %v1326
    %v1503 = vunpack.c.h.b16 %v1326
    %v1504 = vunpack.c.l.b16 %v1327
    %v1505 = vunpack.c.h.b16 %v1327
    %v1506 = vunpack.c.l.b16 %v1328
    %v1507 = vunpack.c.h.b16 %v1328
    %v1508 = vunpack.c.l.b16 %v1329
    %v1509 = vunpack.c.h.b16 %v1329
    %v1510 = vunpack.c.l.b16 %v1330
    %v1511 = vunpack.c.h.b16 %v1330
    %v1512 = vunpack.c.l.b16 %v1331
    %v1513 = vunpack.c.h.b16 %v1331
    %v1514 = vunpack.c.l.b16 %v1332
    %v1515 = vunpack.c.h.b16 %v1332
    %v1516 = vunpack.c.l.b16 %v1333
    %v1517 = vunpack.c.h.b16 %v1333
    %v1518 = vunpack.c.l.b16 %v1334
    %v1519 = vunpack.c.h.b16 %v1334
    %v1520 = vunpack.c.l.b16 %v1335
    %v1521 = vunpack.c.h.b16 %v1335
    %v1522 = vunpack.c.l.b16 %v1336
    %v1523 = vunpack.c.h.b16 %v1336
    %v1524 = vunpack.c.l.b16 %v1337
    %v1525 = vunpack.c.h.b16 %v1337
    %v1526 = vunpack.c.l.b16 %v1338
    %v1527 = vunpack.c.h.b16 %v1338
    %v1528 = vunpack.c.l.b16 %v1339
    %v1529 = vunpack.c.h.b16 %v1339
    %v1530 = vunpack.c.l.b16 %v1340
    %v1531 = vunpack.c.h.b16 %v1340
    %v1532 = vunpack.c.l.b16 %v1341
    %v1533 = vunpack.c.h.b16 %v1341
    %v1534 = vunpack.c.l.b16 %v1342
    %v1535 = vunpack.c.h.b16 %v1342
    %v1536 = vunpack.c.l.b16 %v1343
    %v1537 = vunpack.c.h.b16 %v1343
    %v1538 = vunpack.c.l.b16 %v1344
    %v1539 = vunpack.c.h.b16 %v1344
    %v1540 = vunpack.c.l.b16 %v1345
    %v1541 = vunpack.c.h.b16 %v1345
    %v1542 = vunpack.c.l.b16 %v1346
    %v1543 = vunpack.c.h.b16 %v1346
    %v1544 = vunpack.c.l.b16 %v1347
    %v1545 = vunpack.c.h.b16 %v1347
    %v1546 = vunpack.c.l.b16 %v1348
    %v1547 = vunpack.c.h.b16 %v1348
    %v1548 = vunpack.c.l.b16 %v1349
    %v1549 = vunpack.c.h.b16 %v1349
    %v1550 = vunpack.c.l.b16 %v1350
    %v1551 = vunpack.c.h.b16 %v1350
    %v1552 = vunpack.c.l.b16 %v1351
    %v1553 = vunpack.c.h.b16 %v1351
    %v1554 = vunpack.c.l.b16 %v1352
    %v1555 = vunpack.c.h.b16 %v1352
    %v1556 = vunpack.c.l.b16 %v1353
    %v1557 = vunpack.c.h.b16 %v1353
    %v1558 = vpack.c.b16 %v1432, %v1430
    %v1559 = vpack.c.b16 %v1433, %v1431
    %v1560 = vpack.c.b16 %v1436, %v1434
    %v1561 = vpack.c.b16 %v1437, %v1435
    %v1562 = vpack.c.b16 %v1440, %v1438
    %v1563 = vpack.c.b16 %v1441, %v1439
    %v1564 = vpack.c.b16 %v1444, %v1442
    %v1565 = vpack.c.b16 %v1445, %v1443
    %v1566 = vpack.c.b16 %v1448, %v1446
    %v1567 = vpack.c.b16 %v1449, %v1447
    %v1568 = vpack.c.b16 %v1452, %v1450
    %v1569 = vpack.c.b16 %v1453, %v1451
    %v1570 = vpack.c.b16 %v1456, %v1454
    %v1571 = vpack.c.b16 %v1457, %v1455
    %v1572 = vpack.c.b16 %v1460, %v1458
    %v1573 = vpack.c.b16 %v1461, %v1459
    %v1574 = vpack.c.b16 %v1464, %v1462
    %v1575 = vpack.c.b16 %v1465, %v1463
    %v1576 = vpack.c.b16 %v1468, %v1466
    %v1577 = vpack.c.b16 %v1469, %v1467
    %v1578 = vpack.c.b16 %v1472, %v1470
    %v1579 = vpack.c.b16 %v1473, %v1471
    %v1580 = vpack.c.b16 %v1476, %v1474
    %v1581 = vpack.c.b16 %v1477, %v1475
    %v1582 = vpack.c.b16 %v1480, %v1478
    %v1583 = vpack.c.b16 %v1481, %v1479
    %v1584 = vpack.c.b16 %v1484, %v1482
    %v1585 = vpack.c.b16 %v1485, %v1483
    %v1586 = vpack.c.b16 %v1488, %v1486
    %v1587 = vpack.c.b16 %v1489, %v1487
    %v1588 = vpack.c.b16 %v1492, %v1490
    %v1589 = vpack.c.b16 %v1493, %v1491
    %v1590 = vpack.c.b16 %v1496, %v1494
    %v1591 = vpack.c.b16 %v1497, %v1495
    %v1592 = vpack.c.b16 %v1500, %v1498
    %v1593 = vpack.c.b16 %v1501, %v1499
    %v1594 = vpack.c.b16 %v1504, %v1502
    %v1595 = vpack.c.b16 %v1505, %v1503
    %v1596 = vpack.c.b16 %v1508, %v1506
    %v1597 = vpack.c.b16 %v1509, %v1507
    %v1598 = vpack.c.b16 %v1512, %v1510
    %v1599 = vpack.c.b16 %v1513, %v1511
    %v1600 = vpack.c.b16 %v1516, %v1514
    %v1601 = vpack.c.b16 %v1517, %v1515
    %v1602 = vpack.c.b16 %v1520, %v1518
    %v1603 = vpack.c.b16 %v1521, %v1519
    %v1604 = vpack.c.b16 %v1524, %v1522
    %v1605 = vpack.c.b16 %v1525, %v1523
    %v1606 = vpack.c.b16 %v1528, %v1526
    %v1607 = vpack.c.b16 %v1529, %v1527
    %v1608 = vpack.c.b16 %v1532, %v1530
    %v1609 = vpack.c.b16 %v1533, %v1531
    %v1610 = vpack.c.b16 %v1536, %v1534
    %v1611 = vpack.c.b16 %v1537, %v1535
    %v1612 = vpack.c.b16 %v1540, %v1538
    %v1613 = vpack.c.b16 %v1541, %v1539
    %v1614 = vpack.c.b16 %v1544, %v1542
    %v1615 = vpack.c.b16 %v1545, %v1543
    %v1616 = vpack.c.b16 %v1548, %v1546
    %v1617 = vpack.c.b16 %v1549, %v1547
    %v1618 = vpack.c.b16 %v1552, %v1550
    %v1619 = vpack.c.b16 %v1553, %v1551
    %v1620 = vpack.c.b16 %v1556, %v1554
    %v1621 = vpack.c.b16 %v1557, %v1555
    %1686 = vmatprep.subr.bf16.mxu0 %v1573
    %1687 = vmatpush1.bf16.msra.mxu0 %v1572
    %1688 = vmatprep.subr.bf16.mxu0 %v1571
    %1689 = vmatpush1.bf16.msra.mxu0 %v1570
    %1690 = vmatprep.subr.bf16.mxu0 %v1569
    %1691 = vmatpush1.bf16.msra.mxu0 %v1568
    %1692 = vmatprep.subr.bf16.mxu0 %v1567
    %1693 = vmatpush1.bf16.msra.mxu0 %v1566
    %1694 = vmatprep.subr.bf16.mxu0 %v1565
    %1695 = vmatpush1.bf16.msra.mxu0 %v1564
    %1696 = vmatprep.subr.bf16.mxu0 %v1563
    %1697 = vmatpush1.bf16.msra.mxu0 %v1562
    %1698 = vmatprep.subr.bf16.mxu0 %v1561
    %1699 = vmatpush1.bf16.msra.mxu0 %v1560
    %1700 = vmatprep.subr.bf16.mxu0 %v1559
    %1701 = vmatpush1.bf16.msra.mxu0 %v1558
    %1702 = vmatprep.subr.bf16.mxu0 %v1589
    %1703 = vmatpush2.bf16.msra.mxu0 %v1588
    %1704 = vmatprep.subr.bf16.mxu0 %v1587
    %1705 = vmatpush2.bf16.msra.mxu0 %v1586
    %1706 = vmatprep.subr.bf16.mxu0 %v1585
    %1707 = vmatpush2.bf16.msra.mxu0 %v1584
    %1708 = vmatprep.subr.bf16.mxu0 %v1583
    %1709 = vmatpush2.bf16.msra.mxu0 %v1582
    %1710 = vmatprep.subr.bf16.mxu0 %v1581
    %1711 = vmatpush2.bf16.msra.mxu0 %v1580
    %1712 = vmatprep.subr.bf16.mxu0 %v1579
    %1713 = vmatpush2.bf16.msra.mxu0 %v1578
    %1714 = vmatprep.subr.bf16.mxu0 %v1577
    %1715 = vmatpush2.bf16.msra.mxu0 %v1576
    %1716 = vmatprep.subr.bf16.mxu0 %v1575
    %1717 = vmatpush2.bf16.msra.mxu0 %v1574
    %1718 = vmatprep.mubr.bf16.mxu0 %v1284
    %1719 = vmatmul.mubr.bf16.gmra.mxu0 %v1282
    %v1720 = vpop.f32.mrf.mxu0
    %v1721 = vadd.f32 %v1359, %v1720
    %v1722 = vpop.f32.mrf.mxu0
    %v1723 = vadd.f32 %v1363, %v1722
    %v1724 = vpop.f32.mrf.mxu0
    %v1725 = vadd.f32 %v1359, %v1724
    %v1726 = vpop.f32.mrf.mxu0
    %v1727 = vadd.f32 %v1363, %v1726
    %1728 = vmatprep.mubr.bf16.mxu0 %v1285
    %1729 = vmatmul.mubr.bf16.gmra.mxu0 %v1283
    %v1730 = vpop.f32.mrf.mxu0
    %v1731 = vadd.f32 %v1359, %v1730
    %v1732 = vpop.f32.mrf.mxu0
    %v1733 = vadd.f32 %v1363, %v1732
    %v1734 = vpop.f32.mrf.mxu0
    %v1735 = vadd.f32 %v1359, %v1734
    %v1736 = vpop.f32.mrf.mxu0
    %v1737 = vadd.f32 %v1363, %v1736
    %1738 = vmatprep.mubr.bf16.mxu0 0
    %1739 = vmatmul.mubr.bf16.gmra.mxu0 %v1284
    %v1740 = vpop.f32.mrf.mxu0
    %v1741 = vadd.f32 %v1359, %v1740
    %v1742 = vpop.f32.mrf.mxu0
    %v1743 = vadd.f32 %v1363, %v1742
    %v1744 = vpop.f32.mrf.mxu0
    %v1745 = vadd.f32 %v1359, %v1744
    %v1746 = vpop.f32.mrf.mxu0
    %v1747 = vadd.f32 %v1363, %v1746
    %1748 = vmatprep.mubr.bf16.mxu0 0
    %1749 = vmatmul.mubr.bf16.gmra.mxu0 %v1285
    %v1750 = vpop.f32.mrf.mxu0
    %v1751 = vadd.f32 %v1359, %v1750
    %v1752 = vpop.f32.mrf.mxu0
    %v1753 = vadd.f32 %v1363, %v1752
    %v1754 = vpop.f32.mrf.mxu0
    %v1755 = vadd.f32 %v1359, %v1754
    %v1756 = vpop.f32.mrf.mxu0
    %v1757 = vadd.f32 %v1363, %v1756
    %1758 = vmatprep.mubr.bf16.mxu0 %v1288
    %1759 = vmatmul.mubr.bf16.gmra.mxu0 %v1286
    %v1760 = vpop.f32.mrf.mxu0
    %v1761 = vadd.f32 %v1359, %v1760
    %v1762 = vpop.f32.mrf.mxu0
    %v1763 = vadd.f32 %v1363, %v1762
    %v1764 = vpop.f32.mrf.mxu0
    %v1765 = vadd.f32 %v1359, %v1764
    %v1766 = vpop.f32.mrf.mxu0
    %v1767 = vadd.f32 %v1363, %v1766
    %1768 = vmatprep.mubr.bf16.mxu0 %v1289
    %1769 = vmatmul.mubr.bf16.gmra.mxu0 %v1287
    %v1770 = vpop.f32.mrf.mxu0
    %v1771 = vadd.f32 %v1359, %v1770
    %v1772 = vpop.f32.mrf.mxu0
    %v1773 = vadd.f32 %v1363, %v1772
    %v1774 = vpop.f32.mrf.mxu0
    %v1775 = vadd.f32 %v1359, %v1774
    %v1776 = vpop.f32.mrf.mxu0
    %v1777 = vadd.f32 %v1363, %v1776
    %1778 = vmatprep.mubr.bf16.mxu0 0
    %1779 = vmatmul.mubr.bf16.gmra.mxu0 %v1288
    %v1780 = vpop.f32.mrf.mxu0
    %v1781 = vadd.f32 %v1359, %v1780
    %v1782 = vpop.f32.mrf.mxu0
    %v1783 = vadd.f32 %v1363, %v1782
    %v1784 = vpop.f32.mrf.mxu0
    %v1785 = vadd.f32 %v1359, %v1784
    %v1786 = vpop.f32.mrf.mxu0
    %v1787 = vadd.f32 %v1363, %v1786
    %1788 = vmatprep.mubr.bf16.mxu0 0
    %1789 = vmatmul.mubr.bf16.gmra.mxu0 %v1289
    %v1790 = vpop.f32.mrf.mxu0
    %v1791 = vadd.f32 %v1359, %v1790
    %v1792 = vpop.f32.mrf.mxu0
    %v1793 = vadd.f32 %v1363, %v1792
    %v1794 = vpop.f32.mrf.mxu0
    %v1795 = vadd.f32 %v1359, %v1794
    %v1796 = vpop.f32.mrf.mxu0
    %v1797 = vadd.f32 %v1363, %v1796
    %1798 = vdwg.mxu0
    %1799 = vmatprep.subr.bf16.mxu0 %v1605
    %1800 = vmatpush1.bf16.msra.mxu0 %v1604
    %1801 = vmatprep.subr.bf16.mxu0 %v1603
    %1802 = vmatpush1.bf16.msra.mxu0 %v1602
    %1803 = vmatprep.subr.bf16.mxu0 %v1601
    %1804 = vmatpush1.bf16.msra.mxu0 %v1600
    %1805 = vmatprep.subr.bf16.mxu0 %v1599
    %1806 = vmatpush1.bf16.msra.mxu0 %v1598
    %1807 = vmatprep.subr.bf16.mxu0 %v1597
    %1808 = vmatpush1.bf16.msra.mxu0 %v1596
    %1809 = vmatprep.subr.bf16.mxu0 %v1595
    %1810 = vmatpush1.bf16.msra.mxu0 %v1594
    %1811 = vmatprep.subr.bf16.mxu0 %v1593
    %1812 = vmatpush1.bf16.msra.mxu0 %v1592
    %1813 = vmatprep.subr.bf16.mxu0 %v1591
    %1814 = vmatpush1.bf16.msra.mxu0 %v1590
    %1815 = vmatprep.subr.bf16.mxu0 %v1621
    %1816 = vmatpush2.bf16.msra.mxu0 %v1620
    %1817 = vmatprep.subr.bf16.mxu0 %v1619
    %1818 = vmatpush2.bf16.msra.mxu0 %v1618
    %1819 = vmatprep.subr.bf16.mxu0 %v1617
    %1820 = vmatpush2.bf16.msra.mxu0 %v1616
    %1821 = vmatprep.subr.bf16.mxu0 %v1615
    %1822 = vmatpush2.bf16.msra.mxu0 %v1614
    %1823 = vmatprep.subr.bf16.mxu0 %v1613
    %1824 = vmatpush2.bf16.msra.mxu0 %v1612
    %1825 = vmatprep.subr.bf16.mxu0 %v1611
    %1826 = vmatpush2.bf16.msra.mxu0 %v1610
    %1827 = vmatprep.subr.bf16.mxu0 %v1609
    %1828 = vmatpush2.bf16.msra.mxu0 %v1608
    %1829 = vmatprep.subr.bf16.mxu0 %v1607
    %1830 = vmatpush2.bf16.msra.mxu0 %v1606
    %1831 = vmatprep.mubr.bf16.mxu0 %v1288
    %1832 = vmatmul.mubr.bf16.gmra.mxu0 %v1286
    %v1833 = vpop.f32.mrf.mxu0
    %v1834 = vadd.f32 %v1721, %v1833
    %v1835 = vpop.f32.mrf.mxu0
    %v1836 = vadd.f32 %v1723, %v1835
    %v1837 = vpop.f32.mrf.mxu0
    %v1838 = vadd.f32 %v1725, %v1837
    %v1839 = vpop.f32.mrf.mxu0
    %v1840 = vadd.f32 %v1727, %v1839
    %1841 = vmatprep.mubr.bf16.mxu0 %v1289
    %1842 = vmatmul.mubr.bf16.gmra.mxu0 %v1287
    %v1843 = vpop.f32.mrf.mxu0
    %v1844 = vadd.f32 %v1731, %v1843
    %v1845 = vpop.f32.mrf.mxu0
    %v1846 = vadd.f32 %v1733, %v1845
    %v1847 = vpop.f32.mrf.mxu0
    %v1848 = vadd.f32 %v1735, %v1847
    %v1849 = vpop.f32.mrf.mxu0
    %v1850 = vadd.f32 %v1737, %v1849
    %1851 = vmatprep.mubr.bf16.mxu0 0
    %1852 = vmatmul.mubr.bf16.gmra.mxu0 %v1288
    %v1853 = vpop.f32.mrf.mxu0
    %v1854 = vadd.f32 %v1741, %v1853
    %v1855 = vpop.f32.mrf.mxu0
    %v1856 = vadd.f32 %v1743, %v1855
    %v1857 = vpop.f32.mrf.mxu0
    %v1858 = vadd.f32 %v1745, %v1857
    %v1859 = vpop.f32.mrf.mxu0
    %v1860 = vadd.f32 %v1747, %v1859
    %1861 = vmatprep.mubr.bf16.mxu0 0
    %1862 = vmatmul.mubr.bf16.gmra.mxu0 %v1289
    %v1863 = vpop.f32.mrf.mxu0
    %v1864 = vadd.f32 %v1751, %v1863
    %v1865 = vpop.f32.mrf.mxu0
    %v1866 = vadd.f32 %v1753, %v1865
    %v1867 = vpop.f32.mrf.mxu0
    %v1868 = vadd.f32 %v1755, %v1867
    %v1869 = vpop.f32.mrf.mxu0
    %v1870 = vadd.f32 %v1757, %v1869
    %1871 = vmatprep.mubr.bf16.mxu0 0
    %1872 = vmatmul.mubr.bf16.gmra.mxu0 0
    %v1873 = vpop.f32.mrf.mxu0
    %v1874 = vadd.f32 %v1761, %v1873
    %v1875 = vpop.f32.mrf.mxu0
    %v1876 = vadd.f32 %v1763, %v1875
    %v1877 = vpop.f32.mrf.mxu0
    %v1878 = vadd.f32 %v1765, %v1877
    %v1879 = vpop.f32.mrf.mxu0
    %v1880 = vadd.f32 %v1767, %v1879
    %1881 = vmatprep.mubr.bf16.mxu0 0
    %1882 = vmatmul.mubr.bf16.gmra.mxu0 0
    %v1883 = vpop.f32.mrf.mxu0
    %v1884 = vadd.f32 %v1771, %v1883
    %v1885 = vpop.f32.mrf.mxu0
    %v1886 = vadd.f32 %v1773, %v1885
    %v1887 = vpop.f32.mrf.mxu0
    %v1888 = vadd.f32 %v1775, %v1887
    %v1889 = vpop.f32.mrf.mxu0
    %v1890 = vadd.f32 %v1777, %v1889
    %1891 = vmatprep.mubr.bf16.mxu0 0
    %1892 = vmatmul.mubr.bf16.gmra.mxu0 0
    %v1893 = vpop.f32.mrf.mxu0
    %v1894 = vadd.f32 %v1781, %v1893
    %v1895 = vpop.f32.mrf.mxu0
    %v1896 = vadd.f32 %v1783, %v1895
    %v1897 = vpop.f32.mrf.mxu0
    %v1898 = vadd.f32 %v1785, %v1897
    %v1899 = vpop.f32.mrf.mxu0
    %v1900 = vadd.f32 %v1787, %v1899
    %1901 = vmatprep.mubr.bf16.mxu0 0
    %1902 = vmatmul.mubr.bf16.gmra.mxu0 0
    %v1903 = vpop.f32.mrf.mxu0
    %v1904 = vadd.f32 %v1791, %v1903
    %v1905 = vpop.f32.mrf.mxu0
    %v1906 = vadd.f32 %v1793, %v1905
    %v1907 = vpop.f32.mrf.mxu0
    %v1908 = vadd.f32 %v1795, %v1907
    %v1909 = vpop.f32.mrf.mxu0
    %v1910 = vadd.f32 %v1797, %v1909
    %1911 = vdwg.mxu0
    %v1912 = vtanh.pop %v1834
    %v1913 = vtanh.pop %v1836
    %v1914 = vtanh.pop %v1838
    %v1915 = vtanh.pop %v1840
    %v1916 = vtanh.pop %v1844
    %v1917 = vtanh.pop %v1846
    %v1918 = vtanh.pop %v1848
    %v1919 = vtanh.pop %v1850
    %v1920 = vtanh.pop %v1854
    %v1921 = vtanh.pop %v1856
    %v1922 = vtanh.pop %v1858
    %v1923 = vtanh.pop %v1860
    %v1924 = vtanh.pop %v1864
    %v1925 = vtanh.pop %v1866
    %v1926 = vtanh.pop %v1868
    %v1927 = vtanh.pop %v1870
    %v1928 = vtanh.pop %v1874
    %v1929 = vtanh.pop %v1876
    %v1930 = vtanh.pop %v1878
    %v1931 = vtanh.pop %v1880
    %v1932 = vtanh.pop %v1884
    %v1933 = vtanh.pop %v1886
    %v1934 = vtanh.pop %v1888
    %v1935 = vtanh.pop %v1890
    %v1936 = vtanh.pop %v1894
    %v1937 = vtanh.pop %v1896
    %v1938 = vtanh.pop %v1898
    %v1939 = vtanh.pop %v1900
    %v1940 = vtanh.pop %v1904
    %v1941 = vtanh.pop %v1906
    %v1942 = vtanh.pop %v1908
    %v1943 = vtanh.pop %v1910
    %1944 = vst [vmem:[%s11] sm:$0xff] %v1912
    %1945 = vst [vmem:[%s11 + $0x8] sm:$0xff] %v1913
    %1946 = vst [vmem:[%s11 + $0x10] sm:$0xff] %v1914
    %1947 = vst [vmem:[%s11 + $0x18] sm:$0xff] %v1915
    %1948 = vst [vmem:[%s11 + $0x20] sm:$0xff] %v1916
    %1949 = vst [vmem:[%s11 + $0x28] sm:$0xff] %v1917
    %1950 = vst [vmem:[%s11 + $0x30] sm:$0xff] %v1918
    %1951 = vst [vmem:[%s11 + $0x38] sm:$0xff] %v1919
    %1952 = vst [vmem:[%s11 + $0x40] sm:$0xff] %v1920
    %1953 = vst [vmem:[%s11 + $0x48] sm:$0xff] %v1921
    %1954 = vst [vmem:[%s11 + $0x50] sm:$0xff] %v1922
    %1955 = vst [vmem:[%s11 + $0x58] sm:$0xff] %v1923
    %1956 = vst [vmem:[%s11 + $0x60] sm:$0xff] %v1924
    %1957 = vst [vmem:[%s11 + $0x68] sm:$0xff] %v1925
    %1958 = vst [vmem:[%s11 + $0x70] sm:$0xff] %v1926
    %1959 = vst [vmem:[%s11 + $0x78] sm:$0xff] %v1927
    %1960 = vst [vmem:[%s11 + $0x80] sm:$0xff] %v1928
    %1961 = vst [vmem:[%s11 + $0x88] sm:$0xff] %v1929
    %1962 = vst [vmem:[%s11 + $0x90] sm:$0xff] %v1930
    %1963 = vst [vmem:[%s11 + $0x98] sm:$0xff] %v1931
    %1964 = vst [vmem:[%s11 + $0xa0] sm:$0xff] %v1932
    %1965 = vst [vmem:[%s11 + $0xa8] sm:$0xff] %v1933
    %1966 = vst [vmem:[%s11 + $0xb0] sm:$0xff] %v1934
    %1967 = vst [vmem:[%s11 + $0xb8] sm:$0xff] %v1935
    %1968 = vst [vmem:[%s11 + $0xc0] sm:$0xff] %v1936
    %1969 = vst [vmem:[%s11 + $0xc8] sm:$0xff] %v1937
    %1970 = vst [vmem:[%s11 + $0xd0] sm:$0xff] %v1938
    %1971 = vst [vmem:[%s11 + $0xd8] sm:$0xff] %v1939
    %1972 = vst [vmem:[%s11 + $0xe0] sm:$0xff] %v1940
    %1973 = vst [vmem:[%s11 + $0xe8] sm:$0xff] %v1941
    %1974 = vst [vmem:[%s11 + $0xf0] sm:$0xff] %v1942
    %1975 = vst [vmem:[%s11 + $0xf8] sm:$0xff] %v1943
    // Predicated region
    $region70: #{_lambda_.1} parent=1 // pred_check
      _
    $region71: #{_lambda_.1} parent=1 // pred_check_branch
      %1977 = sbr.rel (0) target = $region73
    $region72: #{_lambda_.1} parent=1 // pred_region
      _
    $region73: #{_lambda_.1} parent=1 // pred_fallthru
      _
    // Predicated region
    $region74: #{_lambda_.1} parent=1 // pred_check
      _
    $region75: #{_lambda_.1} parent=1 // pred_check_branch
      %1979 = sbr.rel (0) target = $region77
    $region76: #{_lambda_.1} parent=1 // pred_region
      _
    $region77: #{_lambda_.1} parent=1 // pred_fallthru
      _
    %1980 = vsyncpa [#allocation3], 1
    %1981 = vsyncpa [#allocation5], 1
    %1982 = vsyncpa [#allocation8], 1
    %1983 = vsyncpa [#allocation11], 1

</llo_original>
